<compile_context>
chip_gen: v5e
topology: v5e:2x2
jax: 0.10.0
libtpu: 0.0.40
codegen_flags: <defaults>
</compile_context>

<pallas_src>
import math
import functools

import jax
import jax.numpy as jnp
from jax.experimental import pallas as pl
from jax.experimental.pallas import tpu as pltpu


# ----------------------------------------------------------------------------- #
# Positional encoding (parameter-setup glue, mirrors get_pe from the PyTorch code)
# ----------------------------------------------------------------------------- #
def get_pe(d_model, max_len=5000):
    position = jnp.arange(0, max_len, dtype=jnp.float32)[:, None]
    div_term = jnp.exp(
        jnp.arange(0, d_model, 2, dtype=jnp.float32) * -(math.log(10000.0) / d_model)
    )
    pe = jnp.zeros((max_len, d_model), jnp.float32)
    pe = pe.at[:, 0::2].set(jnp.sin(position * div_term))
    pe = pe.at[:, 1::2].set(jnp.cos(position * div_term))
    return pe[None]  # (1, max_len, d)


# ----------------------------------------------------------------------------- #
# In-kernel helpers
# ----------------------------------------------------------------------------- #
def _ln(x, g, b, eps):
    # Annotated-transformer-style LayerNorm: a_2 * (x - mean) / (std + eps) + b_2,
    # with torch's default unbiased std (ddof = 1). Exact f32 division (review:
    # approximate reciprocal in LN can fail tight tolerance checks).
    d = x.shape[-1]
    mean = jnp.mean(x, axis=-1, keepdims=True)
    xc = x - mean
    var = jnp.sum(xc * xc, axis=-1, keepdims=True) * (1.0 / (d - 1))
    return g * xc / (jnp.sqrt(var) + eps) + b


# ----------------------------------------------------------------------------- #
# Fused whole-encoder Pallas kernel (one batch element per grid step)
# ----------------------------------------------------------------------------- #
def _encoder_kernel(x_ref, m_ref, wqkv_ref, bqkv_ref, wo_ref, bo_ref,
                    w1_ref, b1_ref, w2_ref, b2_ref,
                    ln1_g_ref, ln1_b_ref, ln2_g_ref, ln2_b_ref,
                    lnf_g_ref, lnf_b_ref, o_ref,
                    *, num_layers, num_heads, eps):
    S, D = x_ref.shape[1], x_ref.shape[2]
    H = num_heads
    Dh = D // H
    scale = 1.0 / math.sqrt(Dh)
    bf16 = jnp.bfloat16

    x = x_ref[0]                                       # (S, D) f32 residual stream
    # Additive key-padding mask, computed once (hoisted out of the layer & head loops).
    neg = jnp.where(m_ref[0] == 0.0, -1e9, 0.0)        # (1, S) f32

    for l in range(num_layers):                        # static unroll; weights resident
        # ---- self-attention sublayer: LN -> fused QKV -> MHA -> Wo -> + residual ----
        y = _ln(x, ln1_g_ref[l], ln1_b_ref[l], eps)
        qkv = jnp.dot(y.astype(bf16), wqkv_ref[l],
                      preferred_element_type=jnp.float32) + bqkv_ref[l]     # (S, 3D) f32
        wo_l = wo_ref[l]                               # (D, D) bf16, loaded once per layer
        acc = jnp.zeros((S, D), jnp.float32)
        for h in range(H):
            qh = (qkv[:, h * Dh:(h + 1) * Dh] * scale).astype(bf16)         # fold 1/sqrt(Dh)
            kh = qkv[:, D + h * Dh:D + (h + 1) * Dh].astype(bf16)
            vh = qkv[:, 2 * D + h * Dh:2 * D + (h + 1) * Dh].astype(bf16)
            # q @ k.T without materializing a transpose (contract last dims).
            s = jax.lax.dot_general(qh, kh, (((1,), (1,)), ((), ())),
                                    preferred_element_type=jnp.float32)     # (S, S)
            s = s + neg                                # masked_fill(mask == 0, -1e9)
            s = s - jnp.max(s, axis=-1, keepdims=True)
            p = jnp.exp(s)
            p = p * pl.reciprocal(jnp.sum(p, axis=-1, keepdims=True), approx=True)
            oh = jnp.dot(p.astype(bf16), vh,
                         preferred_element_type=jnp.float32)                # (S, Dh)
            # Accumulate straight through Wo (replaces the per-head lane concat).
            acc = acc + jnp.dot(oh.astype(bf16), wo_l[h * Dh:(h + 1) * Dh, :],
                                preferred_element_type=jnp.float32)         # (S, D)
        x = x + acc + bo_ref[l]

        # ---- feed-forward sublayer: LN -> W1 -> ReLU -> W2 -> + residual ----
        y = _ln(x, ln2_g_ref[l], ln2_b_ref[l], eps)
        hdn = jnp.maximum(
            jnp.dot(y.astype(bf16), w1_ref[l],
                    preferred_element_type=jnp.float32) + b1_ref[l], 0.0)   # (S, F)
        ff = jnp.dot(hdn.astype(bf16), w2_ref[l],
                     preferred_element_type=jnp.float32) + b2_ref[l]        # (S, D)
        x = x + ff

    # ---- final LayerNorm ----
    o_ref[0] = _ln(x, lnf_g_ref[...], lnf_b_ref[...], eps).astype(o_ref.dtype)


def encoder_pallas(x, mask3, p, *, num_heads, eps=1e-6):
    """x: (B, S, D) f32 residual stream (embed + PE already applied); mask3: (B, 1, S)."""
    B, S, D = x.shape
    L = p["wqkv"].shape[0]
    F = p["w1"].shape[2]

    def resident(shape):
        # Constant block index -> block stays resident in VMEM across the whole grid.
        return pl.BlockSpec(shape, lambda *_: (0,) * len(shape))

    kernel = functools.partial(_encoder_kernel, num_layers=L,
                               num_heads=num_heads, eps=eps)
    return pl.pallas_call(
        kernel,
        grid=(B,),
        in_specs=[
            pl.BlockSpec((1, S, D), lambda b: (b, 0, 0)),      # x
            pl.BlockSpec((1, 1, S), lambda b: (b, 0, 0)),      # key-padding mask
            resident((L, D, 3 * D)), resident((L, 1, 3 * D)),  # wqkv (bf16), bqkv
            resident((L, D, D)), resident((L, 1, D)),          # wo (bf16), bo
            resident((L, D, F)), resident((L, 1, F)),          # w1 (bf16), b1
            resident((L, F, D)), resident((L, 1, D)),          # w2 (bf16), b2
            resident((L, 1, D)), resident((L, 1, D)),          # ln1 gamma/beta
            resident((L, 1, D)), resident((L, 1, D)),          # ln2 gamma/beta
            resident((1, D)), resident((1, D)),                # final ln gamma/beta
        ],
        out_specs=pl.BlockSpec((1, S, D), lambda b: (b, 0, 0)),
        out_shape=jax.ShapeDtypeStruct((B, S, D), jnp.float32),
        input_output_aliases={0: 0},                           # residual stream in-place
        compiler_params=pltpu.CompilerParams(dimension_semantics=("parallel",)),
    )(x, mask3, p["wqkv"], p["bqkv"], p["wo"], p["bo"],
      p["w1"], p["b1"], p["w2"], p["b2"],
      p["ln1_g"], p["ln1_b"], p["ln2_g"], p["ln2_b"],
      p["ln_f_g"], p["ln_f_b"])


# ----------------------------------------------------------------------------- #
# Parameters (deterministic synthetic init, stacked per-layer) and the forward pass
# ----------------------------------------------------------------------------- #
def init_params(key, vocab_n, num_layers, d, d_ff):
    L = num_layers
    keys = jax.random.split(key, 1 + L * 6)

    def w(k, shape, scale=0.02):
        return (scale * jax.random.normal(k, shape)).astype(jnp.float32)

    embed = w(keys[0], (vocab_n, d), 1.0 / math.sqrt(d))
    wqkv, wo, w1, w2 = [], [], [], []
    ki = 1
    for _ in range(L):
        wq_ = w(keys[ki + 0], (d, d))
        wk_ = w(keys[ki + 1], (d, d))
        wv_ = w(keys[ki + 2], (d, d))
        wqkv.append(jnp.concatenate([wq_, wk_, wv_], axis=1))   # fused (d, 3d)
        wo.append(w(keys[ki + 3], (d, d)))
        w1.append(w(keys[ki + 4], (d, d_ff)))
        w2.append(w(keys[ki + 5], (d_ff, d)))
        ki += 6

    return {
        "embed": embed,
        # Matmul weights stored in bf16 (MXU-native; halves weight DMA bytes).
        "wqkv": jnp.stack(wqkv).astype(jnp.bfloat16),
        "bqkv": jnp.zeros((L, 1, 3 * d), jnp.float32),
        "wo": jnp.stack(wo).astype(jnp.bfloat16),
        "bo": jnp.zeros((L, 1, d), jnp.float32),
        "w1": jnp.stack(w1).astype(jnp.bfloat16),
        "b1": jnp.zeros((L, 1, d_ff), jnp.float32),
        "w2": jnp.stack(w2).astype(jnp.bfloat16),
        "b2": jnp.zeros((L, 1, d), jnp.float32),
        "ln1_g": jnp.ones((L, 1, d), jnp.float32),
        "ln1_b": jnp.zeros((L, 1, d), jnp.float32),
        "ln2_g": jnp.ones((L, 1, d), jnp.float32),
        "ln2_b": jnp.zeros((L, 1, d), jnp.float32),
        "ln_f_g": jnp.ones((1, d), jnp.float32),
        "ln_f_b": jnp.zeros((1, d), jnp.float32),
    }


def encoder_forward(params, tokens, mask, *, num_heads, use_rope=False,
                    use_embed=True, pe=None):
    B, S = tokens.shape[:2]
    d = params["embed"].shape[1]

    if use_embed:
        # Embedding lookup (gather) stays in plain JAX glue; scaled by sqrt(d) as in Embed.
        x = jnp.take(params["embed"], tokens, axis=0) * math.sqrt(d)
    else:
        x = tokens
    if not use_rope:
        x = x + pe[:, :S]                                   # x = x + self.pe[:, :x.size(1)]

    mask3 = mask.reshape(B, 1, S).astype(jnp.float32)

    # dropout = 0.0 / eval mode -> identity everywhere.
    return encoder_pallas(x, mask3, params, num_heads=num_heads)


# ----------------------------------------------------------------------------- #
# Main
# ----------------------------------------------------------------------------- #
if __name__ == "__main__":
    vocab_n, num_layers, d, n_heads, max_len, d_ff = 11, 2, 32, 4, 64, 64
    B, S = 2, 8

    key = jax.random.PRNGKey(0)
    kp, kt = jax.random.split(key)

    params = init_params(kp, vocab_n, num_layers, d, d_ff)
    tokens = jax.random.randint(kt, (B, S), 0, vocab_n, dtype=jnp.int32)
    mask = jnp.ones((B, S), jnp.float32).at[1, 6:].set(0.0)   # pad the tail of batch 1
    pe = get_pe(d, max_len=5000)

    fwd = jax.jit(lambda p_, t_, m_, pe_: encoder_forward(
        p_, t_, m_, num_heads=n_heads, use_rope=False, use_embed=True, pe=pe_))
    out = fwd(params, tokens, mask, pe)
    out = jax.block_until_ready(out)

    assert out.shape == (B, S, d), out.shape
    assert bool(jnp.all(jnp.isfinite(out)))
    print("KERNEL_OK")
</pallas_src>

<mosaic_0001>
module attributes {stable_mosaic.version = 11 : i64} {
  func.func @_encoder_kernel(%arg0: i32, %arg1: memref<1x8x32xf32, #tpu.memory_space<vmem>>, %arg2: memref<1x1x8xf32, #tpu.memory_space<vmem>>, %arg3: memref<2x32x96xbf16, #tpu.memory_space<vmem>>, %arg4: memref<2x1x96xf32, #tpu.memory_space<vmem>>, %arg5: memref<2x32x32xbf16, #tpu.memory_space<vmem>>, %arg6: memref<2x1x32xf32, #tpu.memory_space<vmem>>, %arg7: memref<2x32x64xbf16, #tpu.memory_space<vmem>>, %arg8: memref<2x1x64xf32, #tpu.memory_space<vmem>>, %arg9: memref<2x64x32xbf16, #tpu.memory_space<vmem>>, %arg10: memref<2x1x32xf32, #tpu.memory_space<vmem>>, %arg11: memref<2x1x32xf32, #tpu.memory_space<vmem>>, %arg12: memref<2x1x32xf32, #tpu.memory_space<vmem>>, %arg13: memref<2x1x32xf32, #tpu.memory_space<vmem>>, %arg14: memref<2x1x32xf32, #tpu.memory_space<vmem>>, %arg15: memref<1x32xf32, #tpu.memory_space<vmem>>, %arg16: memref<1x32xf32, #tpu.memory_space<vmem>>, %arg17: memref<1x8x32xf32, #tpu.memory_space<vmem>>) attributes {dimension_semantics = [#tpu.dimension_semantics<parallel>], iteration_bounds = array<i64: 2>, scalar_prefetch = 0 : i64, scratch_operands = 0 : i64, tpu.core_type = #tpu.core_type<tc>, window_params = [{transform_indices = @transform_0, window_bounds = array<i64: 1, 8, 32>}, {transform_indices = @transform_1, window_bounds = array<i64: 1, 1, 8>}, {pipeline_mode = #tpu.pipeline_mode<synchronous>, transform_indices = @transform_2, window_bounds = array<i64: 2, 32, 96>}, {pipeline_mode = #tpu.pipeline_mode<synchronous>, transform_indices = @transform_3, window_bounds = array<i64: 2, 1, 96>}, {pipeline_mode = #tpu.pipeline_mode<synchronous>, transform_indices = @transform_4, window_bounds = array<i64: 2, 32, 32>}, {pipeline_mode = #tpu.pipeline_mode<synchronous>, transform_indices = @transform_5, window_bounds = array<i64: 2, 1, 32>}, {pipeline_mode = #tpu.pipeline_mode<synchronous>, transform_indices = @transform_6, window_bounds = array<i64: 2, 32, 64>}, {pipeline_mode = #tpu.pipeline_mode<synchronous>, transform_indices = @transform_7, window_bounds = array<i64: 2, 1, 64>}, {pipeline_mode = #tpu.pipeline_mode<synchronous>, transform_indices = @transform_8, window_bounds = array<i64: 2, 64, 32>}, {pipeline_mode = #tpu.pipeline_mode<synchronous>, transform_indices = @transform_9, window_bounds = array<i64: 2, 1, 32>}, {pipeline_mode = #tpu.pipeline_mode<synchronous>, transform_indices = @transform_10, window_bounds = array<i64: 2, 1, 32>}, {pipeline_mode = #tpu.pipeline_mode<synchronous>, transform_indices = @transform_11, window_bounds = array<i64: 2, 1, 32>}, {pipeline_mode = #tpu.pipeline_mode<synchronous>, transform_indices = @transform_12, window_bounds = array<i64: 2, 1, 32>}, {pipeline_mode = #tpu.pipeline_mode<synchronous>, transform_indices = @transform_13, window_bounds = array<i64: 2, 1, 32>}, {pipeline_mode = #tpu.pipeline_mode<synchronous>, transform_indices = @transform_14, window_bounds = array<i64: 1, 32>}, {pipeline_mode = #tpu.pipeline_mode<synchronous>, transform_indices = @transform_15, window_bounds = array<i64: 1, 32>}, {transform_indices = @transform_16, window_bounds = array<i64: 1, 8, 32>}]} {
    %c0 = arith.constant 0 : index
    %c0_0 = arith.constant 0 : index
    %c0_1 = arith.constant 0 : index
    %0 = vector.load %arg1[%c0, %c0_0, %c0_1] : memref<1x8x32xf32, #tpu.memory_space<vmem>>, vector<1x8x32xf32>
    %1 = vector.shape_cast %0 : vector<1x8x32xf32> to vector<8x32xf32>
    %c0_2 = arith.constant 0 : index
    %c0_3 = arith.constant 0 : index
    %c0_4 = arith.constant 0 : index
    %2 = vector.load %arg2[%c0_2, %c0_3, %c0_4] : memref<1x1x8xf32, #tpu.memory_space<vmem>>, vector<1x1x8xf32>
    %3 = vector.shape_cast %2 : vector<1x1x8xf32> to vector<1x8xf32>
    %cst = arith.constant 0.000000e+00 : f32
    %4 = vector.broadcast %cst : f32 to vector<1x8xf32>
    %5 = arith.cmpf oeq, %3, %4 : vector<1x8xf32>
    %cst_5 = arith.constant -1.000000e+09 : f32
    %cst_6 = arith.constant 0.000000e+00 : f32
    %6 = vector.broadcast %cst_5 : f32 to vector<1x8xf32>
    %7 = vector.broadcast %cst_6 : f32 to vector<1x8xf32>
    %8 = arith.select %5, %6, %7 : vector<1x8xi1>, vector<1x8xf32>
    %c0_7 = arith.constant 0 : index
    %c0_8 = arith.constant 0 : index
    %c0_9 = arith.constant 0 : index
    %9 = vector.load %arg11[%c0_7, %c0_8, %c0_9] : memref<2x1x32xf32, #tpu.memory_space<vmem>>, vector<1x1x32xf32>
    %10 = vector.shape_cast %9 : vector<1x1x32xf32> to vector<1x32xf32>
    %c0_10 = arith.constant 0 : index
    %c0_11 = arith.constant 0 : index
    %c0_12 = arith.constant 0 : index
    %11 = vector.load %arg12[%c0_10, %c0_11, %c0_12] : memref<2x1x32xf32, #tpu.memory_space<vmem>>, vector<1x1x32xf32>
    %12 = vector.shape_cast %11 : vector<1x1x32xf32> to vector<1x32xf32>
    %cst_13 = arith.constant dense<0.000000e+00> : vector<8xf32>
    %13 = vector.multi_reduction <add>, %1, %cst_13 [1] : vector<8x32xf32> to vector<8xf32>
    %14 = vector.shape_cast %13 : vector<8xf32> to vector<8x1xf32>
    %cst_14 = arith.constant 3.200000e+01 : f32
    %15 = vector.broadcast %cst_14 : f32 to vector<8x1xf32>
    %16 = arith.divf %14, %15 : vector<8x1xf32>
    %17 = vector.broadcast %16 : vector<8x1xf32> to vector<8x32xf32>
    %18 = arith.subf %1, %17 : vector<8x32xf32>
    %19 = arith.mulf %18, %18 : vector<8x32xf32>
    %cst_15 = arith.constant dense<0.000000e+00> : vector<8xf32>
    %20 = vector.multi_reduction <add>, %19, %cst_15 [1] : vector<8x32xf32> to vector<8xf32>
    %21 = vector.shape_cast %20 : vector<8xf32> to vector<8x1xf32>
    %cst_16 = arith.constant 0.0322580636 : f32
    %22 = vector.broadcast %cst_16 : f32 to vector<8x1xf32>
    %23 = arith.mulf %21, %22 : vector<8x1xf32>
    %24 = vector.broadcast %10 : vector<1x32xf32> to vector<8x32xf32>
    %25 = arith.mulf %24, %18 : vector<8x32xf32>
    %26 = math.sqrt %23 : vector<8x1xf32>
    %cst_17 = arith.constant 9.99999997E-7 : f32
    %27 = vector.broadcast %cst_17 : f32 to vector<8x1xf32>
    %28 = arith.addf %26, %27 : vector<8x1xf32>
    %29 = vector.broadcast %28 : vector<8x1xf32> to vector<8x32xf32>
    %30 = arith.divf %25, %29 : vector<8x32xf32>
    %31 = vector.broadcast %12 : vector<1x32xf32> to vector<8x32xf32>
    %32 = arith.addf %30, %31 : vector<8x32xf32>
    %33 = arith.truncf %32 : vector<8x32xf32> to vector<8x32xbf16>
    %c0_18 = arith.constant 0 : index
    %c0_19 = arith.constant 0 : index
    %c0_20 = arith.constant 0 : index
    %34 = vector.load %arg3[%c0_18, %c0_19, %c0_20] : memref<2x32x96xbf16, #tpu.memory_space<vmem>>, vector<1x32x96xbf16>
    %35 = vector.shape_cast %34 : vector<1x32x96xbf16> to vector<32x96xbf16>
    %cst_21 = arith.constant dense<0.000000e+00> : vector<8x96xf32>
    %36 = tpu.matmul %33, %35, %cst_21 {dimension_numbers = #tpu.dot_dimension_numbers<[1], [0], [0], [1], [0, 0, 1, 1], [], []>} : vector<8x32xbf16>, vector<32x96xbf16>, vector<8x96xf32> -> vector<8x96xf32>
    %c0_22 = arith.constant 0 : index
    %c0_23 = arith.constant 0 : index
    %c0_24 = arith.constant 0 : index
    %37 = vector.load %arg4[%c0_22, %c0_23, %c0_24] : memref<2x1x96xf32, #tpu.memory_space<vmem>>, vector<1x1x96xf32>
    %38 = vector.shape_cast %37 : vector<1x1x96xf32> to vector<1x96xf32>
    %39 = vector.broadcast %38 : vector<1x96xf32> to vector<8x96xf32>
    %40 = arith.addf %36, %39 : vector<8x96xf32>
    %c0_25 = arith.constant 0 : index
    %c0_26 = arith.constant 0 : index
    %c0_27 = arith.constant 0 : index
    %41 = vector.load %arg5[%c0_25, %c0_26, %c0_27] : memref<2x32x32xbf16, #tpu.memory_space<vmem>>, vector<1x32x32xbf16>
    %42 = vector.shape_cast %41 : vector<1x32x32xbf16> to vector<32x32xbf16>
    %cst_28 = arith.constant 0.000000e+00 : f32
    %43 = vector.broadcast %cst_28 : f32 to vector<8x32xf32>
    %44 = vector.extract_strided_slice %40 {offsets = [0, 0], sizes = [8, 8], strides = [1, 1]} : vector<8x96xf32> to vector<8x8xf32>
    %cst_29 = arith.constant 0.353553385 : f32
    %45 = vector.broadcast %cst_29 : f32 to vector<8x8xf32>
    %46 = arith.mulf %44, %45 : vector<8x8xf32>
    %47 = arith.truncf %46 : vector<8x8xf32> to vector<8x8xbf16>
    %48 = vector.extract_strided_slice %40 {offsets = [0, 32], sizes = [8, 8], strides = [1, 1]} : vector<8x96xf32> to vector<8x8xf32>
    %49 = arith.truncf %48 : vector<8x8xf32> to vector<8x8xbf16>
    %50 = vector.extract_strided_slice %40 {offsets = [0, 64], sizes = [8, 8], strides = [1, 1]} : vector<8x96xf32> to vector<8x8xf32>
    %51 = arith.truncf %50 : vector<8x8xf32> to vector<8x8xbf16>
    %cst_30 = arith.constant dense<0.000000e+00> : vector<8x8xf32>
    %52 = tpu.matmul %47, %49, %cst_30 {dimension_numbers = #tpu.dot_dimension_numbers<[1], [1], [0], [0], [0, 0, 1, 0], [], []>} : vector<8x8xbf16>, vector<8x8xbf16>, vector<8x8xf32> -> vector<8x8xf32>
    %53 = vector.broadcast %8 : vector<1x8xf32> to vector<8x8xf32>
    %54 = arith.addf %52, %53 : vector<8x8xf32>
    %cst_31 = arith.constant dense<0xFF800000> : vector<8xf32>
    %55 = vector.multi_reduction <maximumf>, %54, %cst_31 [1] : vector<8x8xf32> to vector<8xf32>
    %56 = vector.shape_cast %55 : vector<8xf32> to vector<8x1xf32>
    %57 = vector.broadcast %56 : vector<8x1xf32> to vector<8x8xf32>
    %58 = arith.subf %54, %57 : vector<8x8xf32>
    %59 = math.exp %58 : vector<8x8xf32>
    %cst_32 = arith.constant dense<0.000000e+00> : vector<8xf32>
    %60 = vector.multi_reduction <add>, %59, %cst_32 [1] : vector<8x8xf32> to vector<8xf32>
    %61 = vector.shape_cast %60 : vector<8xf32> to vector<8x1xf32>
    %62 = tpu.reciprocal %61 {approx = true} : vector<8x1xf32> -> vector<8x1xf32>
    %63 = vector.broadcast %62 : vector<8x1xf32> to vector<8x8xf32>
    %64 = arith.mulf %59, %63 : vector<8x8xf32>
    %65 = arith.truncf %64 : vector<8x8xf32> to vector<8x8xbf16>
    %cst_33 = arith.constant dense<0.000000e+00> : vector<8x8xf32>
    %66 = tpu.matmul %65, %51, %cst_33 {dimension_numbers = #tpu.dot_dimension_numbers<[1], [0], [0], [1], [0, 0, 1, 1], [], []>} : vector<8x8xbf16>, vector<8x8xbf16>, vector<8x8xf32> -> vector<8x8xf32>
    %67 = arith.truncf %66 : vector<8x8xf32> to vector<8x8xbf16>
    %68 = vector.extract_strided_slice %42 {offsets = [0, 0], sizes = [8, 32], strides = [1, 1]} : vector<32x32xbf16> to vector<8x32xbf16>
    %cst_34 = arith.constant dense<0.000000e+00> : vector<8x32xf32>
    %69 = tpu.matmul %67, %68, %cst_34 {dimension_numbers = #tpu.dot_dimension_numbers<[1], [0], [0], [1], [0, 0, 1, 1], [], []>} : vector<8x8xbf16>, vector<8x32xbf16>, vector<8x32xf32> -> vector<8x32xf32>
    %70 = arith.addf %43, %69 : vector<8x32xf32>
    %71 = vector.extract_strided_slice %40 {offsets = [0, 8], sizes = [8, 8], strides = [1, 1]} : vector<8x96xf32> to vector<8x8xf32>
    %cst_35 = arith.constant 0.353553385 : f32
    %72 = vector.broadcast %cst_35 : f32 to vector<8x8xf32>
    %73 = arith.mulf %71, %72 : vector<8x8xf32>
    %74 = arith.truncf %73 : vector<8x8xf32> to vector<8x8xbf16>
    %75 = vector.extract_strided_slice %40 {offsets = [0, 40], sizes = [8, 8], strides = [1, 1]} : vector<8x96xf32> to vector<8x8xf32>
    %76 = arith.truncf %75 : vector<8x8xf32> to vector<8x8xbf16>
    %77 = vector.extract_strided_slice %40 {offsets = [0, 72], sizes = [8, 8], strides = [1, 1]} : vector<8x96xf32> to vector<8x8xf32>
    %78 = arith.truncf %77 : vector<8x8xf32> to vector<8x8xbf16>
    %cst_36 = arith.constant dense<0.000000e+00> : vector<8x8xf32>
    %79 = tpu.matmul %74, %76, %cst_36 {dimension_numbers = #tpu.dot_dimension_numbers<[1], [1], [0], [0], [0, 0, 1, 0], [], []>} : vector<8x8xbf16>, vector<8x8xbf16>, vector<8x8xf32> -> vector<8x8xf32>
    %80 = vector.broadcast %8 : vector<1x8xf32> to vector<8x8xf32>
    %81 = arith.addf %79, %80 : vector<8x8xf32>
    %cst_37 = arith.constant dense<0xFF800000> : vector<8xf32>
    %82 = vector.multi_reduction <maximumf>, %81, %cst_37 [1] : vector<8x8xf32> to vector<8xf32>
    %83 = vector.shape_cast %82 : vector<8xf32> to vector<8x1xf32>
    %84 = vector.broadcast %83 : vector<8x1xf32> to vector<8x8xf32>
    %85 = arith.subf %81, %84 : vector<8x8xf32>
    %86 = math.exp %85 : vector<8x8xf32>
    %cst_38 = arith.constant dense<0.000000e+00> : vector<8xf32>
    %87 = vector.multi_reduction <add>, %86, %cst_38 [1] : vector<8x8xf32> to vector<8xf32>
    %88 = vector.shape_cast %87 : vector<8xf32> to vector<8x1xf32>
    %89 = tpu.reciprocal %88 {approx = true} : vector<8x1xf32> -> vector<8x1xf32>
    %90 = vector.broadcast %89 : vector<8x1xf32> to vector<8x8xf32>
    %91 = arith.mulf %86, %90 : vector<8x8xf32>
    %92 = arith.truncf %91 : vector<8x8xf32> to vector<8x8xbf16>
    %cst_39 = arith.constant dense<0.000000e+00> : vector<8x8xf32>
    %93 = tpu.matmul %92, %78, %cst_39 {dimension_numbers = #tpu.dot_dimension_numbers<[1], [0], [0], [1], [0, 0, 1, 1], [], []>} : vector<8x8xbf16>, vector<8x8xbf16>, vector<8x8xf32> -> vector<8x8xf32>
    %94 = arith.truncf %93 : vector<8x8xf32> to vector<8x8xbf16>
    %95 = vector.extract_strided_slice %42 {offsets = [8, 0], sizes = [8, 32], strides = [1, 1]} : vector<32x32xbf16> to vector<8x32xbf16>
    %cst_40 = arith.constant dense<0.000000e+00> : vector<8x32xf32>
    %96 = tpu.matmul %94, %95, %cst_40 {dimension_numbers = #tpu.dot_dimension_numbers<[1], [0], [0], [1], [0, 0, 1, 1], [], []>} : vector<8x8xbf16>, vector<8x32xbf16>, vector<8x32xf32> -> vector<8x32xf32>
    %97 = arith.addf %70, %96 : vector<8x32xf32>
    %98 = vector.extract_strided_slice %40 {offsets = [0, 16], sizes = [8, 8], strides = [1, 1]} : vector<8x96xf32> to vector<8x8xf32>
    %cst_41 = arith.constant 0.353553385 : f32
    %99 = vector.broadcast %cst_41 : f32 to vector<8x8xf32>
    %100 = arith.mulf %98, %99 : vector<8x8xf32>
    %101 = arith.truncf %100 : vector<8x8xf32> to vector<8x8xbf16>
    %102 = vector.extract_strided_slice %40 {offsets = [0, 48], sizes = [8, 8], strides = [1, 1]} : vector<8x96xf32> to vector<8x8xf32>
    %103 = arith.truncf %102 : vector<8x8xf32> to vector<8x8xbf16>
    %104 = vector.extract_strided_slice %40 {offsets = [0, 80], sizes = [8, 8], strides = [1, 1]} : vector<8x96xf32> to vector<8x8xf32>
    %105 = arith.truncf %104 : vector<8x8xf32> to vector<8x8xbf16>
    %cst_42 = arith.constant dense<0.000000e+00> : vector<8x8xf32>
    %106 = tpu.matmul %101, %103, %cst_42 {dimension_numbers = #tpu.dot_dimension_numbers<[1], [1], [0], [0], [0, 0, 1, 0], [], []>} : vector<8x8xbf16>, vector<8x8xbf16>, vector<8x8xf32> -> vector<8x8xf32>
    %107 = vector.broadcast %8 : vector<1x8xf32> to vector<8x8xf32>
    %108 = arith.addf %106, %107 : vector<8x8xf32>
    %cst_43 = arith.constant dense<0xFF800000> : vector<8xf32>
    %109 = vector.multi_reduction <maximumf>, %108, %cst_43 [1] : vector<8x8xf32> to vector<8xf32>
    %110 = vector.shape_cast %109 : vector<8xf32> to vector<8x1xf32>
    %111 = vector.broadcast %110 : vector<8x1xf32> to vector<8x8xf32>
    %112 = arith.subf %108, %111 : vector<8x8xf32>
    %113 = math.exp %112 : vector<8x8xf32>
    %cst_44 = arith.constant dense<0.000000e+00> : vector<8xf32>
    %114 = vector.multi_reduction <add>, %113, %cst_44 [1] : vector<8x8xf32> to vector<8xf32>
    %115 = vector.shape_cast %114 : vector<8xf32> to vector<8x1xf32>
    %116 = tpu.reciprocal %115 {approx = true} : vector<8x1xf32> -> vector<8x1xf32>
    %117 = vector.broadcast %116 : vector<8x1xf32> to vector<8x8xf32>
    %118 = arith.mulf %113, %117 : vector<8x8xf32>
    %119 = arith.truncf %118 : vector<8x8xf32> to vector<8x8xbf16>
    %cst_45 = arith.constant dense<0.000000e+00> : vector<8x8xf32>
    %120 = tpu.matmul %119, %105, %cst_45 {dimension_numbers = #tpu.dot_dimension_numbers<[1], [0], [0], [1], [0, 0, 1, 1], [], []>} : vector<8x8xbf16>, vector<8x8xbf16>, vector<8x8xf32> -> vector<8x8xf32>
    %121 = arith.truncf %120 : vector<8x8xf32> to vector<8x8xbf16>
    %122 = vector.extract_strided_slice %42 {offsets = [16, 0], sizes = [8, 32], strides = [1, 1]} : vector<32x32xbf16> to vector<8x32xbf16>
    %cst_46 = arith.constant dense<0.000000e+00> : vector<8x32xf32>
    %123 = tpu.matmul %121, %122, %cst_46 {dimension_numbers = #tpu.dot_dimension_numbers<[1], [0], [0], [1], [0, 0, 1, 1], [], []>} : vector<8x8xbf16>, vector<8x32xbf16>, vector<8x32xf32> -> vector<8x32xf32>
    %124 = arith.addf %97, %123 : vector<8x32xf32>
    %125 = vector.extract_strided_slice %40 {offsets = [0, 24], sizes = [8, 8], strides = [1, 1]} : vector<8x96xf32> to vector<8x8xf32>
    %cst_47 = arith.constant 0.353553385 : f32
    %126 = vector.broadcast %cst_47 : f32 to vector<8x8xf32>
    %127 = arith.mulf %125, %126 : vector<8x8xf32>
    %128 = arith.truncf %127 : vector<8x8xf32> to vector<8x8xbf16>
    %129 = vector.extract_strided_slice %40 {offsets = [0, 56], sizes = [8, 8], strides = [1, 1]} : vector<8x96xf32> to vector<8x8xf32>
    %130 = arith.truncf %129 : vector<8x8xf32> to vector<8x8xbf16>
    %131 = vector.extract_strided_slice %40 {offsets = [0, 88], sizes = [8, 8], strides = [1, 1]} : vector<8x96xf32> to vector<8x8xf32>
    %132 = arith.truncf %131 : vector<8x8xf32> to vector<8x8xbf16>
    %cst_48 = arith.constant dense<0.000000e+00> : vector<8x8xf32>
    %133 = tpu.matmul %128, %130, %cst_48 {dimension_numbers = #tpu.dot_dimension_numbers<[1], [1], [0], [0], [0, 0, 1, 0], [], []>} : vector<8x8xbf16>, vector<8x8xbf16>, vector<8x8xf32> -> vector<8x8xf32>
    %134 = vector.broadcast %8 : vector<1x8xf32> to vector<8x8xf32>
    %135 = arith.addf %133, %134 : vector<8x8xf32>
    %cst_49 = arith.constant dense<0xFF800000> : vector<8xf32>
    %136 = vector.multi_reduction <maximumf>, %135, %cst_49 [1] : vector<8x8xf32> to vector<8xf32>
    %137 = vector.shape_cast %136 : vector<8xf32> to vector<8x1xf32>
    %138 = vector.broadcast %137 : vector<8x1xf32> to vector<8x8xf32>
    %139 = arith.subf %135, %138 : vector<8x8xf32>
    %140 = math.exp %139 : vector<8x8xf32>
    %cst_50 = arith.constant dense<0.000000e+00> : vector<8xf32>
    %141 = vector.multi_reduction <add>, %140, %cst_50 [1] : vector<8x8xf32> to vector<8xf32>
    %142 = vector.shape_cast %141 : vector<8xf32> to vector<8x1xf32>
    %143 = tpu.reciprocal %142 {approx = true} : vector<8x1xf32> -> vector<8x1xf32>
    %144 = vector.broadcast %143 : vector<8x1xf32> to vector<8x8xf32>
    %145 = arith.mulf %140, %144 : vector<8x8xf32>
    %146 = arith.truncf %145 : vector<8x8xf32> to vector<8x8xbf16>
    %cst_51 = arith.constant dense<0.000000e+00> : vector<8x8xf32>
    %147 = tpu.matmul %146, %132, %cst_51 {dimension_numbers = #tpu.dot_dimension_numbers<[1], [0], [0], [1], [0, 0, 1, 1], [], []>} : vector<8x8xbf16>, vector<8x8xbf16>, vector<8x8xf32> -> vector<8x8xf32>
    %148 = arith.truncf %147 : vector<8x8xf32> to vector<8x8xbf16>
    %149 = vector.extract_strided_slice %42 {offsets = [24, 0], sizes = [8, 32], strides = [1, 1]} : vector<32x32xbf16> to vector<8x32xbf16>
    %cst_52 = arith.constant dense<0.000000e+00> : vector<8x32xf32>
    %150 = tpu.matmul %148, %149, %cst_52 {dimension_numbers = #tpu.dot_dimension_numbers<[1], [0], [0], [1], [0, 0, 1, 1], [], []>} : vector<8x8xbf16>, vector<8x32xbf16>, vector<8x32xf32> -> vector<8x32xf32>
    %151 = arith.addf %124, %150 : vector<8x32xf32>
    %152 = arith.addf %1, %151 : vector<8x32xf32>
    %c0_53 = arith.constant 0 : index
    %c0_54 = arith.constant 0 : index
    %c0_55 = arith.constant 0 : index
    %153 = vector.load %arg6[%c0_53, %c0_54, %c0_55] : memref<2x1x32xf32, #tpu.memory_space<vmem>>, vector<1x1x32xf32>
    %154 = vector.shape_cast %153 : vector<1x1x32xf32> to vector<1x32xf32>
    %155 = vector.broadcast %154 : vector<1x32xf32> to vector<8x32xf32>
    %156 = arith.addf %152, %155 : vector<8x32xf32>
    %c0_56 = arith.constant 0 : index
    %c0_57 = arith.constant 0 : index
    %c0_58 = arith.constant 0 : index
    %157 = vector.load %arg13[%c0_56, %c0_57, %c0_58] : memref<2x1x32xf32, #tpu.memory_space<vmem>>, vector<1x1x32xf32>
    %158 = vector.shape_cast %157 : vector<1x1x32xf32> to vector<1x32xf32>
    %c0_59 = arith.constant 0 : index
    %c0_60 = arith.constant 0 : index
    %c0_61 = arith.constant 0 : index
    %159 = vector.load %arg14[%c0_59, %c0_60, %c0_61] : memref<2x1x32xf32, #tpu.memory_space<vmem>>, vector<1x1x32xf32>
    %160 = vector.shape_cast %159 : vector<1x1x32xf32> to vector<1x32xf32>
    %cst_62 = arith.constant dense<0.000000e+00> : vector<8xf32>
    %161 = vector.multi_reduction <add>, %156, %cst_62 [1] : vector<8x32xf32> to vector<8xf32>
    %162 = vector.shape_cast %161 : vector<8xf32> to vector<8x1xf32>
    %cst_63 = arith.constant 3.200000e+01 : f32
    %163 = vector.broadcast %cst_63 : f32 to vector<8x1xf32>
    %164 = arith.divf %162, %163 : vector<8x1xf32>
    %165 = vector.broadcast %164 : vector<8x1xf32> to vector<8x32xf32>
    %166 = arith.subf %156, %165 : vector<8x32xf32>
    %167 = arith.mulf %166, %166 : vector<8x32xf32>
    %cst_64 = arith.constant dense<0.000000e+00> : vector<8xf32>
    %168 = vector.multi_reduction <add>, %167, %cst_64 [1] : vector<8x32xf32> to vector<8xf32>
    %169 = vector.shape_cast %168 : vector<8xf32> to vector<8x1xf32>
    %cst_65 = arith.constant 0.0322580636 : f32
    %170 = vector.broadcast %cst_65 : f32 to vector<8x1xf32>
    %171 = arith.mulf %169, %170 : vector<8x1xf32>
    %172 = vector.broadcast %158 : vector<1x32xf32> to vector<8x32xf32>
    %173 = arith.mulf %172, %166 : vector<8x32xf32>
    %174 = math.sqrt %171 : vector<8x1xf32>
    %cst_66 = arith.constant 9.99999997E-7 : f32
    %175 = vector.broadcast %cst_66 : f32 to vector<8x1xf32>
    %176 = arith.addf %174, %175 : vector<8x1xf32>
    %177 = vector.broadcast %176 : vector<8x1xf32> to vector<8x32xf32>
    %178 = arith.divf %173, %177 : vector<8x32xf32>
    %179 = vector.broadcast %160 : vector<1x32xf32> to vector<8x32xf32>
    %180 = arith.addf %178, %179 : vector<8x32xf32>
    %181 = arith.truncf %180 : vector<8x32xf32> to vector<8x32xbf16>
    %c0_67 = arith.constant 0 : index
    %c0_68 = arith.constant 0 : index
    %c0_69 = arith.constant 0 : index
    %182 = vector.load %arg7[%c0_67, %c0_68, %c0_69] : memref<2x32x64xbf16, #tpu.memory_space<vmem>>, vector<1x32x64xbf16>
    %183 = vector.shape_cast %182 : vector<1x32x64xbf16> to vector<32x64xbf16>
    %cst_70 = arith.constant dense<0.000000e+00> : vector<8x64xf32>
    %184 = tpu.matmul %181, %183, %cst_70 {dimension_numbers = #tpu.dot_dimension_numbers<[1], [0], [0], [1], [0, 0, 1, 1], [], []>} : vector<8x32xbf16>, vector<32x64xbf16>, vector<8x64xf32> -> vector<8x64xf32>
    %c0_71 = arith.constant 0 : index
    %c0_72 = arith.constant 0 : index
    %c0_73 = arith.constant 0 : index
    %185 = vector.load %arg8[%c0_71, %c0_72, %c0_73] : memref<2x1x64xf32, #tpu.memory_space<vmem>>, vector<1x1x64xf32>
    %186 = vector.shape_cast %185 : vector<1x1x64xf32> to vector<1x64xf32>
    %187 = vector.broadcast %186 : vector<1x64xf32> to vector<8x64xf32>
    %188 = arith.addf %184, %187 : vector<8x64xf32>
    %cst_74 = arith.constant 0.000000e+00 : f32
    %189 = vector.broadcast %cst_74 : f32 to vector<8x64xf32>
    %190 = arith.maximumf %188, %189 : vector<8x64xf32>
    %191 = arith.truncf %190 : vector<8x64xf32> to vector<8x64xbf16>
    %c0_75 = arith.constant 0 : index
    %c0_76 = arith.constant 0 : index
    %c0_77 = arith.constant 0 : index
    %192 = vector.load %arg9[%c0_75, %c0_76, %c0_77] : memref<2x64x32xbf16, #tpu.memory_space<vmem>>, vector<1x64x32xbf16>
    %193 = vector.shape_cast %192 : vector<1x64x32xbf16> to vector<64x32xbf16>
    %cst_78 = arith.constant dense<0.000000e+00> : vector<8x32xf32>
    %194 = tpu.matmul %191, %193, %cst_78 {dimension_numbers = #tpu.dot_dimension_numbers<[1], [0], [0], [1], [0, 0, 1, 1], [], []>} : vector<8x64xbf16>, vector<64x32xbf16>, vector<8x32xf32> -> vector<8x32xf32>
    %c0_79 = arith.constant 0 : index
    %c0_80 = arith.constant 0 : index
    %c0_81 = arith.constant 0 : index
    %195 = vector.load %arg10[%c0_79, %c0_80, %c0_81] : memref<2x1x32xf32, #tpu.memory_space<vmem>>, vector<1x1x32xf32>
    %196 = vector.shape_cast %195 : vector<1x1x32xf32> to vector<1x32xf32>
    %197 = vector.broadcast %196 : vector<1x32xf32> to vector<8x32xf32>
    %198 = arith.addf %194, %197 : vector<8x32xf32>
    %199 = arith.addf %156, %198 : vector<8x32xf32>
    %c1 = arith.constant 1 : index
    %c0_82 = arith.constant 0 : index
    %c0_83 = arith.constant 0 : index
    %200 = vector.load %arg11[%c1, %c0_82, %c0_83] : memref<2x1x32xf32, #tpu.memory_space<vmem>>, vector<1x1x32xf32>
    %201 = vector.shape_cast %200 : vector<1x1x32xf32> to vector<1x32xf32>
    %c1_84 = arith.constant 1 : index
    %c0_85 = arith.constant 0 : index
    %c0_86 = arith.constant 0 : index
    %202 = vector.load %arg12[%c1_84, %c0_85, %c0_86] : memref<2x1x32xf32, #tpu.memory_space<vmem>>, vector<1x1x32xf32>
    %203 = vector.shape_cast %202 : vector<1x1x32xf32> to vector<1x32xf32>
    %cst_87 = arith.constant dense<0.000000e+00> : vector<8xf32>
    %204 = vector.multi_reduction <add>, %199, %cst_87 [1] : vector<8x32xf32> to vector<8xf32>
    %205 = vector.shape_cast %204 : vector<8xf32> to vector<8x1xf32>
    %cst_88 = arith.constant 3.200000e+01 : f32
    %206 = vector.broadcast %cst_88 : f32 to vector<8x1xf32>
    %207 = arith.divf %205, %206 : vector<8x1xf32>
    %208 = vector.broadcast %207 : vector<8x1xf32> to vector<8x32xf32>
    %209 = arith.subf %199, %208 : vector<8x32xf32>
    %210 = arith.mulf %209, %209 : vector<8x32xf32>
    %cst_89 = arith.constant dense<0.000000e+00> : vector<8xf32>
    %211 = vector.multi_reduction <add>, %210, %cst_89 [1] : vector<8x32xf32> to vector<8xf32>
    %212 = vector.shape_cast %211 : vector<8xf32> to vector<8x1xf32>
    %cst_90 = arith.constant 0.0322580636 : f32
    %213 = vector.broadcast %cst_90 : f32 to vector<8x1xf32>
    %214 = arith.mulf %212, %213 : vector<8x1xf32>
    %215 = vector.broadcast %201 : vector<1x32xf32> to vector<8x32xf32>
    %216 = arith.mulf %215, %209 : vector<8x32xf32>
    %217 = math.sqrt %214 : vector<8x1xf32>
    %cst_91 = arith.constant 9.99999997E-7 : f32
    %218 = vector.broadcast %cst_91 : f32 to vector<8x1xf32>
    %219 = arith.addf %217, %218 : vector<8x1xf32>
    %220 = vector.broadcast %219 : vector<8x1xf32> to vector<8x32xf32>
    %221 = arith.divf %216, %220 : vector<8x32xf32>
    %222 = vector.broadcast %203 : vector<1x32xf32> to vector<8x32xf32>
    %223 = arith.addf %221, %222 : vector<8x32xf32>
    %224 = arith.truncf %223 : vector<8x32xf32> to vector<8x32xbf16>
    %c1_92 = arith.constant 1 : index
    %c0_93 = arith.constant 0 : index
    %c0_94 = arith.constant 0 : index
    %225 = vector.load %arg3[%c1_92, %c0_93, %c0_94] : memref<2x32x96xbf16, #tpu.memory_space<vmem>>, vector<1x32x96xbf16>
    %226 = vector.shape_cast %225 : vector<1x32x96xbf16> to vector<32x96xbf16>
    %cst_95 = arith.constant dense<0.000000e+00> : vector<8x96xf32>
    %227 = tpu.matmul %224, %226, %cst_95 {dimension_numbers = #tpu.dot_dimension_numbers<[1], [0], [0], [1], [0, 0, 1, 1], [], []>} : vector<8x32xbf16>, vector<32x96xbf16>, vector<8x96xf32> -> vector<8x96xf32>
    %c1_96 = arith.constant 1 : index
    %c0_97 = arith.constant 0 : index
    %c0_98 = arith.constant 0 : index
    %228 = vector.load %arg4[%c1_96, %c0_97, %c0_98] : memref<2x1x96xf32, #tpu.memory_space<vmem>>, vector<1x1x96xf32>
    %229 = vector.shape_cast %228 : vector<1x1x96xf32> to vector<1x96xf32>
    %230 = vector.broadcast %229 : vector<1x96xf32> to vector<8x96xf32>
    %231 = arith.addf %227, %230 : vector<8x96xf32>
    %c1_99 = arith.constant 1 : index
    %c0_100 = arith.constant 0 : index
    %c0_101 = arith.constant 0 : index
    %232 = vector.load %arg5[%c1_99, %c0_100, %c0_101] : memref<2x32x32xbf16, #tpu.memory_space<vmem>>, vector<1x32x32xbf16>
    %233 = vector.shape_cast %232 : vector<1x32x32xbf16> to vector<32x32xbf16>
    %cst_102 = arith.constant 0.000000e+00 : f32
    %234 = vector.broadcast %cst_102 : f32 to vector<8x32xf32>
    %235 = vector.extract_strided_slice %231 {offsets = [0, 0], sizes = [8, 8], strides = [1, 1]} : vector<8x96xf32> to vector<8x8xf32>
    %cst_103 = arith.constant 0.353553385 : f32
    %236 = vector.broadcast %cst_103 : f32 to vector<8x8xf32>
    %237 = arith.mulf %235, %236 : vector<8x8xf32>
    %238 = arith.truncf %237 : vector<8x8xf32> to vector<8x8xbf16>
    %239 = vector.extract_strided_slice %231 {offsets = [0, 32], sizes = [8, 8], strides = [1, 1]} : vector<8x96xf32> to vector<8x8xf32>
    %240 = arith.truncf %239 : vector<8x8xf32> to vector<8x8xbf16>
    %241 = vector.extract_strided_slice %231 {offsets = [0, 64], sizes = [8, 8], strides = [1, 1]} : vector<8x96xf32> to vector<8x8xf32>
    %242 = arith.truncf %241 : vector<8x8xf32> to vector<8x8xbf16>
    %cst_104 = arith.constant dense<0.000000e+00> : vector<8x8xf32>
    %243 = tpu.matmul %238, %240, %cst_104 {dimension_numbers = #tpu.dot_dimension_numbers<[1], [1], [0], [0], [0, 0, 1, 0], [], []>} : vector<8x8xbf16>, vector<8x8xbf16>, vector<8x8xf32> -> vector<8x8xf32>
    %244 = vector.broadcast %8 : vector<1x8xf32> to vector<8x8xf32>
    %245 = arith.addf %243, %244 : vector<8x8xf32>
    %cst_105 = arith.constant dense<0xFF800000> : vector<8xf32>
    %246 = vector.multi_reduction <maximumf>, %245, %cst_105 [1] : vector<8x8xf32> to vector<8xf32>
    %247 = vector.shape_cast %246 : vector<8xf32> to vector<8x1xf32>
    %248 = vector.broadcast %247 : vector<8x1xf32> to vector<8x8xf32>
    %249 = arith.subf %245, %248 : vector<8x8xf32>
    %250 = math.exp %249 : vector<8x8xf32>
    %cst_106 = arith.constant dense<0.000000e+00> : vector<8xf32>
    %251 = vector.multi_reduction <add>, %250, %cst_106 [1] : vector<8x8xf32> to vector<8xf32>
    %252 = vector.shape_cast %251 : vector<8xf32> to vector<8x1xf32>
    %253 = tpu.reciprocal %252 {approx = true} : vector<8x1xf32> -> vector<8x1xf32>
    %254 = vector.broadcast %253 : vector<8x1xf32> to vector<8x8xf32>
    %255 = arith.mulf %250, %254 : vector<8x8xf32>
    %256 = arith.truncf %255 : vector<8x8xf32> to vector<8x8xbf16>
    %cst_107 = arith.constant dense<0.000000e+00> : vector<8x8xf32>
    %257 = tpu.matmul %256, %242, %cst_107 {dimension_numbers = #tpu.dot_dimension_numbers<[1], [0], [0], [1], [0, 0, 1, 1], [], []>} : vector<8x8xbf16>, vector<8x8xbf16>, vector<8x8xf32> -> vector<8x8xf32>
    %258 = arith.truncf %257 : vector<8x8xf32> to vector<8x8xbf16>
    %259 = vector.extract_strided_slice %233 {offsets = [0, 0], sizes = [8, 32], strides = [1, 1]} : vector<32x32xbf16> to vector<8x32xbf16>
    %cst_108 = arith.constant dense<0.000000e+00> : vector<8x32xf32>
    %260 = tpu.matmul %258, %259, %cst_108 {dimension_numbers = #tpu.dot_dimension_numbers<[1], [0], [0], [1], [0, 0, 1, 1], [], []>} : vector<8x8xbf16>, vector<8x32xbf16>, vector<8x32xf32> -> vector<8x32xf32>
    %261 = arith.addf %234, %260 : vector<8x32xf32>
    %262 = vector.extract_strided_slice %231 {offsets = [0, 8], sizes = [8, 8], strides = [1, 1]} : vector<8x96xf32> to vector<8x8xf32>
    %cst_109 = arith.constant 0.353553385 : f32
    %263 = vector.broadcast %cst_109 : f32 to vector<8x8xf32>
    %264 = arith.mulf %262, %263 : vector<8x8xf32>
    %265 = arith.truncf %264 : vector<8x8xf32> to vector<8x8xbf16>
    %266 = vector.extract_strided_slice %231 {offsets = [0, 40], sizes = [8, 8], strides = [1, 1]} : vector<8x96xf32> to vector<8x8xf32>
    %267 = arith.truncf %266 : vector<8x8xf32> to vector<8x8xbf16>
    %268 = vector.extract_strided_slice %231 {offsets = [0, 72], sizes = [8, 8], strides = [1, 1]} : vector<8x96xf32> to vector<8x8xf32>
    %269 = arith.truncf %268 : vector<8x8xf32> to vector<8x8xbf16>
    %cst_110 = arith.constant dense<0.000000e+00> : vector<8x8xf32>
    %270 = tpu.matmul %265, %267, %cst_110 {dimension_numbers = #tpu.dot_dimension_numbers<[1], [1], [0], [0], [0, 0, 1, 0], [], []>} : vector<8x8xbf16>, vector<8x8xbf16>, vector<8x8xf32> -> vector<8x8xf32>
    %271 = vector.broadcast %8 : vector<1x8xf32> to vector<8x8xf32>
    %272 = arith.addf %270, %271 : vector<8x8xf32>
    %cst_111 = arith.constant dense<0xFF800000> : vector<8xf32>
    %273 = vector.multi_reduction <maximumf>, %272, %cst_111 [1] : vector<8x8xf32> to vector<8xf32>
    %274 = vector.shape_cast %273 : vector<8xf32> to vector<8x1xf32>
    %275 = vector.broadcast %274 : vector<8x1xf32> to vector<8x8xf32>
    %276 = arith.subf %272, %275 : vector<8x8xf32>
    %277 = math.exp %276 : vector<8x8xf32>
    %cst_112 = arith.constant dense<0.000000e+00> : vector<8xf32>
    %278 = vector.multi_reduction <add>, %277, %cst_112 [1] : vector<8x8xf32> to vector<8xf32>
    %279 = vector.shape_cast %278 : vector<8xf32> to vector<8x1xf32>
    %280 = tpu.reciprocal %279 {approx = true} : vector<8x1xf32> -> vector<8x1xf32>
    %281 = vector.broadcast %280 : vector<8x1xf32> to vector<8x8xf32>
    %282 = arith.mulf %277, %281 : vector<8x8xf32>
    %283 = arith.truncf %282 : vector<8x8xf32> to vector<8x8xbf16>
    %cst_113 = arith.constant dense<0.000000e+00> : vector<8x8xf32>
    %284 = tpu.matmul %283, %269, %cst_113 {dimension_numbers = #tpu.dot_dimension_numbers<[1], [0], [0], [1], [0, 0, 1, 1], [], []>} : vector<8x8xbf16>, vector<8x8xbf16>, vector<8x8xf32> -> vector<8x8xf32>
    %285 = arith.truncf %284 : vector<8x8xf32> to vector<8x8xbf16>
    %286 = vector.extract_strided_slice %233 {offsets = [8, 0], sizes = [8, 32], strides = [1, 1]} : vector<32x32xbf16> to vector<8x32xbf16>
    %cst_114 = arith.constant dense<0.000000e+00> : vector<8x32xf32>
    %287 = tpu.matmul %285, %286, %cst_114 {dimension_numbers = #tpu.dot_dimension_numbers<[1], [0], [0], [1], [0, 0, 1, 1], [], []>} : vector<8x8xbf16>, vector<8x32xbf16>, vector<8x32xf32> -> vector<8x32xf32>
    %288 = arith.addf %261, %287 : vector<8x32xf32>
    %289 = vector.extract_strided_slice %231 {offsets = [0, 16], sizes = [8, 8], strides = [1, 1]} : vector<8x96xf32> to vector<8x8xf32>
    %cst_115 = arith.constant 0.353553385 : f32
    %290 = vector.broadcast %cst_115 : f32 to vector<8x8xf32>
    %291 = arith.mulf %289, %290 : vector<8x8xf32>
    %292 = arith.truncf %291 : vector<8x8xf32> to vector<8x8xbf16>
    %293 = vector.extract_strided_slice %231 {offsets = [0, 48], sizes = [8, 8], strides = [1, 1]} : vector<8x96xf32> to vector<8x8xf32>
    %294 = arith.truncf %293 : vector<8x8xf32> to vector<8x8xbf16>
    %295 = vector.extract_strided_slice %231 {offsets = [0, 80], sizes = [8, 8], strides = [1, 1]} : vector<8x96xf32> to vector<8x8xf32>
    %296 = arith.truncf %295 : vector<8x8xf32> to vector<8x8xbf16>
    %cst_116 = arith.constant dense<0.000000e+00> : vector<8x8xf32>
    %297 = tpu.matmul %292, %294, %cst_116 {dimension_numbers = #tpu.dot_dimension_numbers<[1], [1], [0], [0], [0, 0, 1, 0], [], []>} : vector<8x8xbf16>, vector<8x8xbf16>, vector<8x8xf32> -> vector<8x8xf32>
    %298 = vector.broadcast %8 : vector<1x8xf32> to vector<8x8xf32>
    %299 = arith.addf %297, %298 : vector<8x8xf32>
    %cst_117 = arith.constant dense<0xFF800000> : vector<8xf32>
    %300 = vector.multi_reduction <maximumf>, %299, %cst_117 [1] : vector<8x8xf32> to vector<8xf32>
    %301 = vector.shape_cast %300 : vector<8xf32> to vector<8x1xf32>
    %302 = vector.broadcast %301 : vector<8x1xf32> to vector<8x8xf32>
    %303 = arith.subf %299, %302 : vector<8x8xf32>
    %304 = math.exp %303 : vector<8x8xf32>
    %cst_118 = arith.constant dense<0.000000e+00> : vector<8xf32>
    %305 = vector.multi_reduction <add>, %304, %cst_118 [1] : vector<8x8xf32> to vector<8xf32>
    %306 = vector.shape_cast %305 : vector<8xf32> to vector<8x1xf32>
    %307 = tpu.reciprocal %306 {approx = true} : vector<8x1xf32> -> vector<8x1xf32>
    %308 = vector.broadcast %307 : vector<8x1xf32> to vector<8x8xf32>
    %309 = arith.mulf %304, %308 : vector<8x8xf32>
    %310 = arith.truncf %309 : vector<8x8xf32> to vector<8x8xbf16>
    %cst_119 = arith.constant dense<0.000000e+00> : vector<8x8xf32>
    %311 = tpu.matmul %310, %296, %cst_119 {dimension_numbers = #tpu.dot_dimension_numbers<[1], [0], [0], [1], [0, 0, 1, 1], [], []>} : vector<8x8xbf16>, vector<8x8xbf16>, vector<8x8xf32> -> vector<8x8xf32>
    %312 = arith.truncf %311 : vector<8x8xf32> to vector<8x8xbf16>
    %313 = vector.extract_strided_slice %233 {offsets = [16, 0], sizes = [8, 32], strides = [1, 1]} : vector<32x32xbf16> to vector<8x32xbf16>
    %cst_120 = arith.constant dense<0.000000e+00> : vector<8x32xf32>
    %314 = tpu.matmul %312, %313, %cst_120 {dimension_numbers = #tpu.dot_dimension_numbers<[1], [0], [0], [1], [0, 0, 1, 1], [], []>} : vector<8x8xbf16>, vector<8x32xbf16>, vector<8x32xf32> -> vector<8x32xf32>
    %315 = arith.addf %288, %314 : vector<8x32xf32>
    %316 = vector.extract_strided_slice %231 {offsets = [0, 24], sizes = [8, 8], strides = [1, 1]} : vector<8x96xf32> to vector<8x8xf32>
    %cst_121 = arith.constant 0.353553385 : f32
    %317 = vector.broadcast %cst_121 : f32 to vector<8x8xf32>
    %318 = arith.mulf %316, %317 : vector<8x8xf32>
    %319 = arith.truncf %318 : vector<8x8xf32> to vector<8x8xbf16>
    %320 = vector.extract_strided_slice %231 {offsets = [0, 56], sizes = [8, 8], strides = [1, 1]} : vector<8x96xf32> to vector<8x8xf32>
    %321 = arith.truncf %320 : vector<8x8xf32> to vector<8x8xbf16>
    %322 = vector.extract_strided_slice %231 {offsets = [0, 88], sizes = [8, 8], strides = [1, 1]} : vector<8x96xf32> to vector<8x8xf32>
    %323 = arith.truncf %322 : vector<8x8xf32> to vector<8x8xbf16>
    %cst_122 = arith.constant dense<0.000000e+00> : vector<8x8xf32>
    %324 = tpu.matmul %319, %321, %cst_122 {dimension_numbers = #tpu.dot_dimension_numbers<[1], [1], [0], [0], [0, 0, 1, 0], [], []>} : vector<8x8xbf16>, vector<8x8xbf16>, vector<8x8xf32> -> vector<8x8xf32>
    %325 = vector.broadcast %8 : vector<1x8xf32> to vector<8x8xf32>
    %326 = arith.addf %324, %325 : vector<8x8xf32>
    %cst_123 = arith.constant dense<0xFF800000> : vector<8xf32>
    %327 = vector.multi_reduction <maximumf>, %326, %cst_123 [1] : vector<8x8xf32> to vector<8xf32>
    %328 = vector.shape_cast %327 : vector<8xf32> to vector<8x1xf32>
    %329 = vector.broadcast %328 : vector<8x1xf32> to vector<8x8xf32>
    %330 = arith.subf %326, %329 : vector<8x8xf32>
    %331 = math.exp %330 : vector<8x8xf32>
    %cst_124 = arith.constant dense<0.000000e+00> : vector<8xf32>
    %332 = vector.multi_reduction <add>, %331, %cst_124 [1] : vector<8x8xf32> to vector<8xf32>
    %333 = vector.shape_cast %332 : vector<8xf32> to vector<8x1xf32>
    %334 = tpu.reciprocal %333 {approx = true} : vector<8x1xf32> -> vector<8x1xf32>
    %335 = vector.broadcast %334 : vector<8x1xf32> to vector<8x8xf32>
    %336 = arith.mulf %331, %335 : vector<8x8xf32>
    %337 = arith.truncf %336 : vector<8x8xf32> to vector<8x8xbf16>
    %cst_125 = arith.constant dense<0.000000e+00> : vector<8x8xf32>
    %338 = tpu.matmul %337, %323, %cst_125 {dimension_numbers = #tpu.dot_dimension_numbers<[1], [0], [0], [1], [0, 0, 1, 1], [], []>} : vector<8x8xbf16>, vector<8x8xbf16>, vector<8x8xf32> -> vector<8x8xf32>
    %339 = arith.truncf %338 : vector<8x8xf32> to vector<8x8xbf16>
    %340 = vector.extract_strided_slice %233 {offsets = [24, 0], sizes = [8, 32], strides = [1, 1]} : vector<32x32xbf16> to vector<8x32xbf16>
    %cst_126 = arith.constant dense<0.000000e+00> : vector<8x32xf32>
    %341 = tpu.matmul %339, %340, %cst_126 {dimension_numbers = #tpu.dot_dimension_numbers<[1], [0], [0], [1], [0, 0, 1, 1], [], []>} : vector<8x8xbf16>, vector<8x32xbf16>, vector<8x32xf32> -> vector<8x32xf32>
    %342 = arith.addf %315, %341 : vector<8x32xf32>
    %343 = arith.addf %199, %342 : vector<8x32xf32>
    %c1_127 = arith.constant 1 : index
    %c0_128 = arith.constant 0 : index
    %c0_129 = arith.constant 0 : index
    %344 = vector.load %arg6[%c1_127, %c0_128, %c0_129] : memref<2x1x32xf32, #tpu.memory_space<vmem>>, vector<1x1x32xf32>
    %345 = vector.shape_cast %344 : vector<1x1x32xf32> to vector<1x32xf32>
    %346 = vector.broadcast %345 : vector<1x32xf32> to vector<8x32xf32>
    %347 = arith.addf %343, %346 : vector<8x32xf32>
    %c1_130 = arith.constant 1 : index
    %c0_131 = arith.constant 0 : index
    %c0_132 = arith.constant 0 : index
    %348 = vector.load %arg13[%c1_130, %c0_131, %c0_132] : memref<2x1x32xf32, #tpu.memory_space<vmem>>, vector<1x1x32xf32>
    %349 = vector.shape_cast %348 : vector<1x1x32xf32> to vector<1x32xf32>
    %c1_133 = arith.constant 1 : index
    %c0_134 = arith.constant 0 : index
    %c0_135 = arith.constant 0 : index
    %350 = vector.load %arg14[%c1_133, %c0_134, %c0_135] : memref<2x1x32xf32, #tpu.memory_space<vmem>>, vector<1x1x32xf32>
    %351 = vector.shape_cast %350 : vector<1x1x32xf32> to vector<1x32xf32>
    %cst_136 = arith.constant dense<0.000000e+00> : vector<8xf32>
    %352 = vector.multi_reduction <add>, %347, %cst_136 [1] : vector<8x32xf32> to vector<8xf32>
    %353 = vector.shape_cast %352 : vector<8xf32> to vector<8x1xf32>
    %cst_137 = arith.constant 3.200000e+01 : f32
    %354 = vector.broadcast %cst_137 : f32 to vector<8x1xf32>
    %355 = arith.divf %353, %354 : vector<8x1xf32>
    %356 = vector.broadcast %355 : vector<8x1xf32> to vector<8x32xf32>
    %357 = arith.subf %347, %356 : vector<8x32xf32>
    %358 = arith.mulf %357, %357 : vector<8x32xf32>
    %cst_138 = arith.constant dense<0.000000e+00> : vector<8xf32>
    %359 = vector.multi_reduction <add>, %358, %cst_138 [1] : vector<8x32xf32> to vector<8xf32>
    %360 = vector.shape_cast %359 : vector<8xf32> to vector<8x1xf32>
    %cst_139 = arith.constant 0.0322580636 : f32
    %361 = vector.broadcast %cst_139 : f32 to vector<8x1xf32>
    %362 = arith.mulf %360, %361 : vector<8x1xf32>
    %363 = vector.broadcast %349 : vector<1x32xf32> to vector<8x32xf32>
    %364 = arith.mulf %363, %357 : vector<8x32xf32>
    %365 = math.sqrt %362 : vector<8x1xf32>
    %cst_140 = arith.constant 9.99999997E-7 : f32
    %366 = vector.broadcast %cst_140 : f32 to vector<8x1xf32>
    %367 = arith.addf %365, %366 : vector<8x1xf32>
    %368 = vector.broadcast %367 : vector<8x1xf32> to vector<8x32xf32>
    %369 = arith.divf %364, %368 : vector<8x32xf32>
    %370 = vector.broadcast %351 : vector<1x32xf32> to vector<8x32xf32>
    %371 = arith.addf %369, %370 : vector<8x32xf32>
    %372 = arith.truncf %371 : vector<8x32xf32> to vector<8x32xbf16>
    %c1_141 = arith.constant 1 : index
    %c0_142 = arith.constant 0 : index
    %c0_143 = arith.constant 0 : index
    %373 = vector.load %arg7[%c1_141, %c0_142, %c0_143] : memref<2x32x64xbf16, #tpu.memory_space<vmem>>, vector<1x32x64xbf16>
    %374 = vector.shape_cast %373 : vector<1x32x64xbf16> to vector<32x64xbf16>
    %cst_144 = arith.constant dense<0.000000e+00> : vector<8x64xf32>
    %375 = tpu.matmul %372, %374, %cst_144 {dimension_numbers = #tpu.dot_dimension_numbers<[1], [0], [0], [1], [0, 0, 1, 1], [], []>} : vector<8x32xbf16>, vector<32x64xbf16>, vector<8x64xf32> -> vector<8x64xf32>
    %c1_145 = arith.constant 1 : index
    %c0_146 = arith.constant 0 : index
    %c0_147 = arith.constant 0 : index
    %376 = vector.load %arg8[%c1_145, %c0_146, %c0_147] : memref<2x1x64xf32, #tpu.memory_space<vmem>>, vector<1x1x64xf32>
    %377 = vector.shape_cast %376 : vector<1x1x64xf32> to vector<1x64xf32>
    %378 = vector.broadcast %377 : vector<1x64xf32> to vector<8x64xf32>
    %379 = arith.addf %375, %378 : vector<8x64xf32>
    %cst_148 = arith.constant 0.000000e+00 : f32
    %380 = vector.broadcast %cst_148 : f32 to vector<8x64xf32>
    %381 = arith.maximumf %379, %380 : vector<8x64xf32>
    %382 = arith.truncf %381 : vector<8x64xf32> to vector<8x64xbf16>
    %c1_149 = arith.constant 1 : index
    %c0_150 = arith.constant 0 : index
    %c0_151 = arith.constant 0 : index
    %383 = vector.load %arg9[%c1_149, %c0_150, %c0_151] : memref<2x64x32xbf16, #tpu.memory_space<vmem>>, vector<1x64x32xbf16>
    %384 = vector.shape_cast %383 : vector<1x64x32xbf16> to vector<64x32xbf16>
    %cst_152 = arith.constant dense<0.000000e+00> : vector<8x32xf32>
    %385 = tpu.matmul %382, %384, %cst_152 {dimension_numbers = #tpu.dot_dimension_numbers<[1], [0], [0], [1], [0, 0, 1, 1], [], []>} : vector<8x64xbf16>, vector<64x32xbf16>, vector<8x32xf32> -> vector<8x32xf32>
    %c1_153 = arith.constant 1 : index
    %c0_154 = arith.constant 0 : index
    %c0_155 = arith.constant 0 : index
    %386 = vector.load %arg10[%c1_153, %c0_154, %c0_155] : memref<2x1x32xf32, #tpu.memory_space<vmem>>, vector<1x1x32xf32>
    %387 = vector.shape_cast %386 : vector<1x1x32xf32> to vector<1x32xf32>
    %388 = vector.broadcast %387 : vector<1x32xf32> to vector<8x32xf32>
    %389 = arith.addf %385, %388 : vector<8x32xf32>
    %390 = arith.addf %347, %389 : vector<8x32xf32>
    %c0_156 = arith.constant 0 : index
    %c0_157 = arith.constant 0 : index
    %391 = vector.load %arg15[%c0_156, %c0_157] : memref<1x32xf32, #tpu.memory_space<vmem>>, vector<1x32xf32>
    %c0_158 = arith.constant 0 : index
    %c0_159 = arith.constant 0 : index
    %392 = vector.load %arg16[%c0_158, %c0_159] : memref<1x32xf32, #tpu.memory_space<vmem>>, vector<1x32xf32>
    %cst_160 = arith.constant dense<0.000000e+00> : vector<8xf32>
    %393 = vector.multi_reduction <add>, %390, %cst_160 [1] : vector<8x32xf32> to vector<8xf32>
    %394 = vector.shape_cast %393 : vector<8xf32> to vector<8x1xf32>
    %cst_161 = arith.constant 3.200000e+01 : f32
    %395 = vector.broadcast %cst_161 : f32 to vector<8x1xf32>
    %396 = arith.divf %394, %395 : vector<8x1xf32>
    %397 = vector.broadcast %396 : vector<8x1xf32> to vector<8x32xf32>
    %398 = arith.subf %390, %397 : vector<8x32xf32>
    %399 = arith.mulf %398, %398 : vector<8x32xf32>
    %cst_162 = arith.constant dense<0.000000e+00> : vector<8xf32>
    %400 = vector.multi_reduction <add>, %399, %cst_162 [1] : vector<8x32xf32> to vector<8xf32>
    %401 = vector.shape_cast %400 : vector<8xf32> to vector<8x1xf32>
    %cst_163 = arith.constant 0.0322580636 : f32
    %402 = vector.broadcast %cst_163 : f32 to vector<8x1xf32>
    %403 = arith.mulf %401, %402 : vector<8x1xf32>
    %404 = vector.broadcast %391 : vector<1x32xf32> to vector<8x32xf32>
    %405 = arith.mulf %404, %398 : vector<8x32xf32>
    %406 = math.sqrt %403 : vector<8x1xf32>
    %cst_164 = arith.constant 9.99999997E-7 : f32
    %407 = vector.broadcast %cst_164 : f32 to vector<8x1xf32>
    %408 = arith.addf %406, %407 : vector<8x1xf32>
    %409 = vector.broadcast %408 : vector<8x1xf32> to vector<8x32xf32>
    %410 = arith.divf %405, %409 : vector<8x32xf32>
    %411 = vector.broadcast %392 : vector<1x32xf32> to vector<8x32xf32>
    %412 = arith.addf %410, %411 : vector<8x32xf32>
    %c0_165 = arith.constant 0 : index
    %c0_166 = arith.constant 0 : index
    %c0_167 = arith.constant 0 : index
    %413 = vector.load %arg17[%c0_165, %c0_166, %c0_167] : memref<1x8x32xf32, #tpu.memory_space<vmem>>, vector<1x8x32xf32>
    %414 = vector.shape_cast %413 : vector<1x8x32xf32> to vector<8x32xf32>
    %415 = vector.shape_cast %412 : vector<8x32xf32> to vector<1x8x32xf32>
    tpu.vector_store %arg17[%c0_165, %c0_166, %c0_167], %415 {strides = array<i32>} : memref<1x8x32xf32, #tpu.memory_space<vmem>>, vector<1x8x32xf32>,
    return
  }
  func.func @transform_0(%arg0: i32) -> (i32, i32, i32) {
    %c0_i32 = arith.constant 0 : i32
    %c0_i32_0 = arith.constant 0 : i32
    %c0_i32_1 = arith.constant 0 : i32
    return %arg0, %c0_i32, %c0_i32_0 : i32, i32, i32
  }
  func.func @transform_1(%arg0: i32) -> (i32, i32, i32) {
    %c0_i32 = arith.constant 0 : i32
    %c0_i32_0 = arith.constant 0 : i32
    %c0_i32_1 = arith.constant 0 : i32
    return %arg0, %c0_i32, %c0_i32_0 : i32, i32, i32
  }
  func.func @transform_2(%arg0: i32) -> (i32, i32, i32) {
    %c0_i32 = arith.constant 0 : i32
    %c0_i32_0 = arith.constant 0 : i32
    %c0_i32_1 = arith.constant 0 : i32
    %c0_i32_2 = arith.constant 0 : i32
    return %c0_i32, %c0_i32_0, %c0_i32_1 : i32, i32, i32
  }
  func.func @transform_3(%arg0: i32) -> (i32, i32, i32) {
    %c0_i32 = arith.constant 0 : i32
    %c0_i32_0 = arith.constant 0 : i32
    %c0_i32_1 = arith.constant 0 : i32
    %c0_i32_2 = arith.constant 0 : i32
    return %c0_i32, %c0_i32_0, %c0_i32_1 : i32, i32, i32
  }
  func.func @transform_4(%arg0: i32) -> (i32, i32, i32) {
    %c0_i32 = arith.constant 0 : i32
    %c0_i32_0 = arith.constant 0 : i32
    %c0_i32_1 = arith.constant 0 : i32
    %c0_i32_2 = arith.constant 0 : i32
    return %c0_i32, %c0_i32_0, %c0_i32_1 : i32, i32, i32
  }
  func.func @transform_5(%arg0: i32) -> (i32, i32, i32) {
    %c0_i32 = arith.constant 0 : i32
    %c0_i32_0 = arith.constant 0 : i32
    %c0_i32_1 = arith.constant 0 : i32
    %c0_i32_2 = arith.constant 0 : i32
    return %c0_i32, %c0_i32_0, %c0_i32_1 : i32, i32, i32
  }
  func.func @transform_6(%arg0: i32) -> (i32, i32, i32) {
    %c0_i32 = arith.constant 0 : i32
    %c0_i32_0 = arith.constant 0 : i32
    %c0_i32_1 = arith.constant 0 : i32
    %c0_i32_2 = arith.constant 0 : i32
    return %c0_i32, %c0_i32_0, %c0_i32_1 : i32, i32, i32
  }
  func.func @transform_7(%arg0: i32) -> (i32, i32, i32) {
    %c0_i32 = arith.constant 0 : i32
    %c0_i32_0 = arith.constant 0 : i32
    %c0_i32_1 = arith.constant 0 : i32
    %c0_i32_2 = arith.constant 0 : i32
    return %c0_i32, %c0_i32_0, %c0_i32_1 : i32, i32, i32
  }
  func.func @transform_8(%arg0: i32) -> (i32, i32, i32) {
    %c0_i32 = arith.constant 0 : i32
    %c0_i32_0 = arith.constant 0 : i32
    %c0_i32_1 = arith.constant 0 : i32
    %c0_i32_2 = arith.constant 0 : i32
    return %c0_i32, %c0_i32_0, %c0_i32_1 : i32, i32, i32
  }
  func.func @transform_9(%arg0: i32) -> (i32, i32, i32) {
    %c0_i32 = arith.constant 0 : i32
    %c0_i32_0 = arith.constant 0 : i32
    %c0_i32_1 = arith.constant 0 : i32
    %c0_i32_2 = arith.constant 0 : i32
    return %c0_i32, %c0_i32_0, %c0_i32_1 : i32, i32, i32
  }
  func.func @transform_10(%arg0: i32) -> (i32, i32, i32) {
    %c0_i32 = arith.constant 0 : i32
    %c0_i32_0 = arith.constant 0 : i32
    %c0_i32_1 = arith.constant 0 : i32
    %c0_i32_2 = arith.constant 0 : i32
    return %c0_i32, %c0_i32_0, %c0_i32_1 : i32, i32, i32
  }
  func.func @transform_11(%arg0: i32) -> (i32, i32, i32) {
    %c0_i32 = arith.constant 0 : i32
    %c0_i32_0 = arith.constant 0 : i32
    %c0_i32_1 = arith.constant 0 : i32
    %c0_i32_2 = arith.constant 0 : i32
    return %c0_i32, %c0_i32_0, %c0_i32_1 : i32, i32, i32
  }
  func.func @transform_12(%arg0: i32) -> (i32, i32, i32) {
    %c0_i32 = arith.constant 0 : i32
    %c0_i32_0 = arith.constant 0 : i32
    %c0_i32_1 = arith.constant 0 : i32
    %c0_i32_2 = arith.constant 0 : i32
    return %c0_i32, %c0_i32_0, %c0_i32_1 : i32, i32, i32
  }
  func.func @transform_13(%arg0: i32) -> (i32, i32, i32) {
    %c0_i32 = arith.constant 0 : i32
    %c0_i32_0 = arith.constant 0 : i32
    %c0_i32_1 = arith.constant 0 : i32
    %c0_i32_2 = arith.constant 0 : i32
    return %c0_i32, %c0_i32_0, %c0_i32_1 : i32, i32, i32
  }
  func.func @transform_14(%arg0: i32) -> (i32, i32) {
    %c0_i32 = arith.constant 0 : i32
    %c0_i32_0 = arith.constant 0 : i32
    %c0_i32_1 = arith.constant 0 : i32
    return %c0_i32, %c0_i32_0 : i32, i32
  }
  func.func @transform_15(%arg0: i32) -> (i32, i32) {
    %c0_i32 = arith.constant 0 : i32
    %c0_i32_0 = arith.constant 0 : i32
    %c0_i32_1 = arith.constant 0 : i32
    return %c0_i32, %c0_i32_0 : i32, i32
  }
  func.func @transform_16(%arg0: i32) -> (i32, i32, i32) {
    %c0_i32 = arith.constant 0 : i32
    %c0_i32_0 = arith.constant 0 : i32
    %c0_i32_1 = arith.constant 0 : i32
    return %arg0, %c0_i32, %c0_i32_0 : i32, i32, i32
  }
}

</mosaic_0001>

<llo_original>
// kernel: _lambda_.1
$region0: #{_lambda_.1}
  #allocation0 [shape = 'u32[]', space=smem, size = 0x4, offset = 0x4, fixed_abs, tag = 'smem constant byte address 0x4 - core index']
  #allocation1 [shape = 'u32[72,128]{1,0:T(1,128)}', space=vmem, size = 0x9000, scoped, tag = 'internal scratch']
  %s0 = inlined_call_operand.hbm [shape: f32[2,8,32], index: 0, kind: input, shape index: {}, may-alias: {0,16}]
  %s1 = inlined_call_operand.vmem [shape: f32[2,1,8], index: 1, kind: input, shape index: {}]
  %s2 = inlined_call_operand.vmem [shape: bf16[2,32,96], index: 2, kind: input, shape index: {}]
  %s3 = inlined_call_operand.vmem [shape: f32[2,1,96], index: 3, kind: input, shape index: {}]
  %s4 = inlined_call_operand.vmem [shape: bf16[2,32,32], index: 4, kind: input, shape index: {}]
  %s5 = inlined_call_operand.vmem [shape: f32[2,1,32], index: 5, kind: input, shape index: {}]
  %s6 = inlined_call_operand.vmem [shape: bf16[2,32,64], index: 6, kind: input, shape index: {}]
  %s7 = inlined_call_operand.vmem [shape: f32[2,1,64], index: 7, kind: input, shape index: {}]
  %s8 = inlined_call_operand.vmem [shape: bf16[2,64,32], index: 8, kind: input, shape index: {}]
  %s9 = inlined_call_operand.vmem [shape: f32[2,1,32], index: 9, kind: input, shape index: {}]
  %s10 = inlined_call_operand.vmem [shape: f32[2,1,32], index: 10, kind: input, shape index: {}]
  %s11 = inlined_call_operand.vmem [shape: f32[2,1,32], index: 11, kind: input, shape index: {}]
  %s12 = inlined_call_operand.vmem [shape: f32[2,1,32], index: 12, kind: input, shape index: {}]
  %s13 = inlined_call_operand.vmem [shape: f32[2,1,32], index: 13, kind: input, shape index: {}]
  %s14 = inlined_call_operand.vmem [shape: f32[1,32], index: 14, kind: input, shape index: {}]
  %s15 = inlined_call_operand.vmem [shape: f32[1,32], index: 15, kind: input, shape index: {}]
  %s16 = inlined_call_operand.hbm [shape: f32[2,8,32], index: 16, kind: output, shape index: {}, may-alias: {0,16}]
  %s17 = sld [smem:[#allocation0]]
  $region101: #{_lambda_.1} parent=0
    _
  %s19 = ssub.s32 1, %s17
  %s20 = scalar_select 0, %s19, %s17
  $region1: #{_lambda_.1} parent=0
    #allocation2 [shape = 'u8[8192]{0}', space=vmem, size = 0x2000, scoped, tag = 'input window, operand 0']
    #allocation3 [shape = 's32[2]{0}', space=sflag, size = 0x8, scoped, tag = 'scoped memory for _lambda_.1']
    #allocation4 [shape = 's32[2]{0}', space=sflag, size = 0x8, scoped, tag = 'scoped memory for _lambda_.1']
    #allocation5 [shape = 'u8[8192]{0}', space=vmem, size = 0x2000, scoped, tag = 'output window, operand 0']
    %21 = vsyncpa [#allocation3], 0
    %s22 = scalar_lea.sflag [#allocation3], 1
    %23 = vsyncpa %s22, 0
    %24 = vsyncpa [#allocation4], 0
    %s25 = scalar_lea.sflag [#allocation4], 1
    %26 = vsyncpa %s25, 0
    loop: start=0, step=1, limit=4
    $region2: #{_lambda_.1} parent=1 // loop_pre_header
      _
    $region3: #{_lambda_.1} parent=1 // loop_header
      %s28 = sphi 0, %s32
      %p29 = scmp.ge.s32.totalorder %s28, 4
      %s38 = sphi 0, %s40
      %s41 = sphi 0, %s38
      %s42 = sphi 0, %s41
      %s58 = sphi 0, %s42
      %s64 = sphi 0, %s66
      %s67 = sphi 0, %s64
      %s68 = sphi 0, %s67
      %s84 = sphi 0, %s68
      %s88 = sphi 0, %s88
      %s90 = sphi 0, %s88
      %s91 = sphi 0, %s90
      %s105 = sphi 0, %s91
      %s109 = sphi 0, %s109
      %s111 = sphi 0, %s109
      %s112 = sphi 0, %s111
      %s126 = sphi 0, %s112
      %s130 = sphi 0, %s130
      %s132 = sphi 0, %s130
      %s133 = sphi 0, %s132
      %s147 = sphi 0, %s133
      %s151 = sphi 0, %s151
      %s153 = sphi 0, %s151
      %s154 = sphi 0, %s153
      %s168 = sphi 0, %s154
      %s172 = sphi 0, %s172
      %s174 = sphi 0, %s172
      %s175 = sphi 0, %s174
      %s189 = sphi 0, %s175
      %s193 = sphi 0, %s193
      %s195 = sphi 0, %s193
      %s196 = sphi 0, %s195
      %s210 = sphi 0, %s196
      %s214 = sphi 0, %s214
      %s216 = sphi 0, %s214
      %s217 = sphi 0, %s216
      %s231 = sphi 0, %s217
      %s235 = sphi 0, %s235
      %s237 = sphi 0, %s235
      %s238 = sphi 0, %s237
      %s252 = sphi 0, %s238
      %s256 = sphi 0, %s256
      %s258 = sphi 0, %s256
      %s259 = sphi 0, %s258
      %s273 = sphi 0, %s259
      %s277 = sphi 0, %s277
      %s279 = sphi 0, %s277
      %s280 = sphi 0, %s279
      %s294 = sphi 0, %s280
      %s298 = sphi 0, %s298
      %s300 = sphi 0, %s298
      %s301 = sphi 0, %s300
      %s315 = sphi 0, %s301
      %s319 = sphi 0, %s319
      %s321 = sphi 0, %s319
      %s322 = sphi 0, %s321
      %s336 = sphi 0, %s322
      %s340 = sphi 0, %s340
      %s342 = sphi 0, %s340
      %s343 = sphi 0, %s342
      %s357 = sphi 0, %s343
      %s361 = sphi 0, %s361
      %s363 = sphi 0, %s361
      %s364 = sphi 0, %s363
      %s378 = sphi 0, %s364
      %s384 = sphi 0, %s386
      %s387 = sphi 0, %s384
      %s388 = sphi 0, %s387
      %s404 = sphi 0, %s388
    $region4: #{_lambda_.1} parent=1 // loop_header_branch
      %31 = sbr.rel (%p29) target = $region8
    $region5: #{_lambda_.1} parent=1 // loop_body
      %s33 = ssub.s32 %s28, 1
      %s34 = ssub.s32 %s28, 2
      %s35 = sadd.s32 %s28, 1
      %s36 = ssub.s32 %s28, %s35
      %p37 = scmp.eq.s32.totalorder %s36, 0
      %s39 = sadd.s32 %s38, 1
      %s40 = scalar_select %p37, %s38, %s39
      %p43 = pneg %p37
      %p44 = scmp.eq.s32.totalorder %s28, 1
      %p45 = por %p43, %p44
      %p46 = scmp.ne.s32.totalorder %s38, %s41
      %p47 = scmp.eq.s32.totalorder %s28, 0
      %p48 = por %p46, %p47
      %p49 = scmp.ne.s32.totalorder %s38, %s41
      %p50 = scmp.eq.s32.totalorder %s33, 1
      %p51 = por %p49, %p50
      %p52 = scmp.ne.s32.totalorder %s41, %s42
      %p53 = scmp.eq.s32.totalorder %s33, 0
      %p54 = por %p52, %p53
      %p55 = scmp.ne.s32.totalorder %s41, %s42
      %p56 = scmp.eq.s32.totalorder %s34, 1
      %p57 = por %p55, %p56
      %p59 = scmp.ne.s32.totalorder %s42, %s58
      %p60 = scmp.eq.s32.totalorder %s34, 0
      %p61 = por %p59, %p60
      %s62 = ssub.s32 %s28, %s35
      %p63 = scmp.eq.s32.totalorder %s62, 0
      %s65 = sadd.s32 %s64, 1
      %s66 = scalar_select %p63, %s64, %s65
      %p69 = pneg %p63
      %p70 = scmp.eq.s32.totalorder %s28, 1
      %p71 = por %p69, %p70
      %p72 = scmp.ne.s32.totalorder %s64, %s67
      %p73 = scmp.eq.s32.totalorder %s28, 0
      %p74 = por %p72, %p73
      %p75 = scmp.ne.s32.totalorder %s64, %s67
      %p76 = scmp.eq.s32.totalorder %s33, 1
      %p77 = por %p75, %p76
      %p78 = scmp.ne.s32.totalorder %s67, %s68
      %p79 = scmp.eq.s32.totalorder %s33, 0
      %p80 = por %p78, %p79
      %p81 = scmp.ne.s32.totalorder %s67, %s68
      %p82 = scmp.eq.s32.totalorder %s34, 1
      %p83 = por %p81, %p82
      %p85 = scmp.ne.s32.totalorder %s68, %s84
      %p86 = scmp.eq.s32.totalorder %s34, 0
      %p87 = por %p85, %p86
      %s89 = sadd.s32 %s88, 1
      %p92 = scmp.eq.s32.totalorder %s28, 1
      %p93 = scmp.ne.s32.totalorder %s88, %s90
      %p94 = scmp.eq.s32.totalorder %s28, 0
      %p95 = por %p93, %p94
      %p96 = scmp.ne.s32.totalorder %s88, %s90
      %p97 = scmp.eq.s32.totalorder %s33, 1
      %p98 = por %p96, %p97
      %p99 = scmp.ne.s32.totalorder %s90, %s91
      %p100 = scmp.eq.s32.totalorder %s33, 0
      %p101 = por %p99, %p100
      %p102 = scmp.ne.s32.totalorder %s90, %s91
      %p103 = scmp.eq.s32.totalorder %s34, 1
      %p104 = por %p102, %p103
      %p106 = scmp.ne.s32.totalorder %s91, %s105
      %p107 = scmp.eq.s32.totalorder %s34, 0
      %p108 = por %p106, %p107
      %s110 = sadd.s32 %s109, 1
      %p113 = scmp.eq.s32.totalorder %s28, 1
      %p114 = scmp.ne.s32.totalorder %s109, %s111
      %p115 = scmp.eq.s32.totalorder %s28, 0
      %p116 = por %p114, %p115
      %p117 = scmp.ne.s32.totalorder %s109, %s111
      %p118 = scmp.eq.s32.totalorder %s33, 1
      %p119 = por %p117, %p118
      %p120 = scmp.ne.s32.totalorder %s111, %s112
      %p121 = scmp.eq.s32.totalorder %s33, 0
      %p122 = por %p120, %p121
      %p123 = scmp.ne.s32.totalorder %s111, %s112
      %p124 = scmp.eq.s32.totalorder %s34, 1
      %p125 = por %p123, %p124
      %p127 = scmp.ne.s32.totalorder %s112, %s126
      %p128 = scmp.eq.s32.totalorder %s34, 0
      %p129 = por %p127, %p128
      %s131 = sadd.s32 %s130, 1
      %p134 = scmp.eq.s32.totalorder %s28, 1
      %p135 = scmp.ne.s32.totalorder %s130, %s132
      %p136 = scmp.eq.s32.totalorder %s28, 0
      %p137 = por %p135, %p136
      %p138 = scmp.ne.s32.totalorder %s130, %s132
      %p139 = scmp.eq.s32.totalorder %s33, 1
      %p140 = por %p138, %p139
      %p141 = scmp.ne.s32.totalorder %s132, %s133
      %p142 = scmp.eq.s32.totalorder %s33, 0
      %p143 = por %p141, %p142
      %p144 = scmp.ne.s32.totalorder %s132, %s133
      %p145 = scmp.eq.s32.totalorder %s34, 1
      %p146 = por %p144, %p145
      %p148 = scmp.ne.s32.totalorder %s133, %s147
      %p149 = scmp.eq.s32.totalorder %s34, 0
      %p150 = por %p148, %p149
      %s152 = sadd.s32 %s151, 1
      %p155 = scmp.eq.s32.totalorder %s28, 1
      %p156 = scmp.ne.s32.totalorder %s151, %s153
      %p157 = scmp.eq.s32.totalorder %s28, 0
      %p158 = por %p156, %p157
      %p159 = scmp.ne.s32.totalorder %s151, %s153
      %p160 = scmp.eq.s32.totalorder %s33, 1
      %p161 = por %p159, %p160
      %p162 = scmp.ne.s32.totalorder %s153, %s154
      %p163 = scmp.eq.s32.totalorder %s33, 0
      %p164 = por %p162, %p163
      %p165 = scmp.ne.s32.totalorder %s153, %s154
      %p166 = scmp.eq.s32.totalorder %s34, 1
      %p167 = por %p165, %p166
      %p169 = scmp.ne.s32.totalorder %s154, %s168
      %p170 = scmp.eq.s32.totalorder %s34, 0
      %p171 = por %p169, %p170
      %s173 = sadd.s32 %s172, 1
      %p176 = scmp.eq.s32.totalorder %s28, 1
      %p177 = scmp.ne.s32.totalorder %s172, %s174
      %p178 = scmp.eq.s32.totalorder %s28, 0
      %p179 = por %p177, %p178
      %p180 = scmp.ne.s32.totalorder %s172, %s174
      %p181 = scmp.eq.s32.totalorder %s33, 1
      %p182 = por %p180, %p181
      %p183 = scmp.ne.s32.totalorder %s174, %s175
      %p184 = scmp.eq.s32.totalorder %s33, 0
      %p185 = por %p183, %p184
      %p186 = scmp.ne.s32.totalorder %s174, %s175
      %p187 = scmp.eq.s32.totalorder %s34, 1
      %p188 = por %p186, %p187
      %p190 = scmp.ne.s32.totalorder %s175, %s189
      %p191 = scmp.eq.s32.totalorder %s34, 0
      %p192 = por %p190, %p191
      %s194 = sadd.s32 %s193, 1
      %p197 = scmp.eq.s32.totalorder %s28, 1
      %p198 = scmp.ne.s32.totalorder %s193, %s195
      %p199 = scmp.eq.s32.totalorder %s28, 0
      %p200 = por %p198, %p199
      %p201 = scmp.ne.s32.totalorder %s193, %s195
      %p202 = scmp.eq.s32.totalorder %s33, 1
      %p203 = por %p201, %p202
      %p204 = scmp.ne.s32.totalorder %s195, %s196
      %p205 = scmp.eq.s32.totalorder %s33, 0
      %p206 = por %p204, %p205
      %p207 = scmp.ne.s32.totalorder %s195, %s196
      %p208 = scmp.eq.s32.totalorder %s34, 1
      %p209 = por %p207, %p208
      %p211 = scmp.ne.s32.totalorder %s196, %s210
      %p212 = scmp.eq.s32.totalorder %s34, 0
      %p213 = por %p211, %p212
      %s215 = sadd.s32 %s214, 1
      %p218 = scmp.eq.s32.totalorder %s28, 1
      %p219 = scmp.ne.s32.totalorder %s214, %s216
      %p220 = scmp.eq.s32.totalorder %s28, 0
      %p221 = por %p219, %p220
      %p222 = scmp.ne.s32.totalorder %s214, %s216
      %p223 = scmp.eq.s32.totalorder %s33, 1
      %p224 = por %p222, %p223
      %p225 = scmp.ne.s32.totalorder %s216, %s217
      %p226 = scmp.eq.s32.totalorder %s33, 0
      %p227 = por %p225, %p226
      %p228 = scmp.ne.s32.totalorder %s216, %s217
      %p229 = scmp.eq.s32.totalorder %s34, 1
      %p230 = por %p228, %p229
      %p232 = scmp.ne.s32.totalorder %s217, %s231
      %p233 = scmp.eq.s32.totalorder %s34, 0
      %p234 = por %p232, %p233
      %s236 = sadd.s32 %s235, 1
      %p239 = scmp.eq.s32.totalorder %s28, 1
      %p240 = scmp.ne.s32.totalorder %s235, %s237
      %p241 = scmp.eq.s32.totalorder %s28, 0
      %p242 = por %p240, %p241
      %p243 = scmp.ne.s32.totalorder %s235, %s237
      %p244 = scmp.eq.s32.totalorder %s33, 1
      %p245 = por %p243, %p244
      %p246 = scmp.ne.s32.totalorder %s237, %s238
      %p247 = scmp.eq.s32.totalorder %s33, 0
      %p248 = por %p246, %p247
      %p249 = scmp.ne.s32.totalorder %s237, %s238
      %p250 = scmp.eq.s32.totalorder %s34, 1
      %p251 = por %p249, %p250
      %p253 = scmp.ne.s32.totalorder %s238, %s252
      %p254 = scmp.eq.s32.totalorder %s34, 0
      %p255 = por %p253, %p254
      %s257 = sadd.s32 %s256, 1
      %p260 = scmp.eq.s32.totalorder %s28, 1
      %p261 = scmp.ne.s32.totalorder %s256, %s258
      %p262 = scmp.eq.s32.totalorder %s28, 0
      %p263 = por %p261, %p262
      %p264 = scmp.ne.s32.totalorder %s256, %s258
      %p265 = scmp.eq.s32.totalorder %s33, 1
      %p266 = por %p264, %p265
      %p267 = scmp.ne.s32.totalorder %s258, %s259
      %p268 = scmp.eq.s32.totalorder %s33, 0
      %p269 = por %p267, %p268
      %p270 = scmp.ne.s32.totalorder %s258, %s259
      %p271 = scmp.eq.s32.totalorder %s34, 1
      %p272 = por %p270, %p271
      %p274 = scmp.ne.s32.totalorder %s259, %s273
      %p275 = scmp.eq.s32.totalorder %s34, 0
      %p276 = por %p274, %p275
      %s278 = sadd.s32 %s277, 1
      %p281 = scmp.eq.s32.totalorder %s28, 1
      %p282 = scmp.ne.s32.totalorder %s277, %s279
      %p283 = scmp.eq.s32.totalorder %s28, 0
      %p284 = por %p282, %p283
      %p285 = scmp.ne.s32.totalorder %s277, %s279
      %p286 = scmp.eq.s32.totalorder %s33, 1
      %p287 = por %p285, %p286
      %p288 = scmp.ne.s32.totalorder %s279, %s280
      %p289 = scmp.eq.s32.totalorder %s33, 0
      %p290 = por %p288, %p289
      %p291 = scmp.ne.s32.totalorder %s279, %s280
      %p292 = scmp.eq.s32.totalorder %s34, 1
      %p293 = por %p291, %p292
      %p295 = scmp.ne.s32.totalorder %s280, %s294
      %p296 = scmp.eq.s32.totalorder %s34, 0
      %p297 = por %p295, %p296
      %s299 = sadd.s32 %s298, 1
      %p302 = scmp.eq.s32.totalorder %s28, 1
      %p303 = scmp.ne.s32.totalorder %s298, %s300
      %p304 = scmp.eq.s32.totalorder %s28, 0
      %p305 = por %p303, %p304
      %p306 = scmp.ne.s32.totalorder %s298, %s300
      %p307 = scmp.eq.s32.totalorder %s33, 1
      %p308 = por %p306, %p307
      %p309 = scmp.ne.s32.totalorder %s300, %s301
      %p310 = scmp.eq.s32.totalorder %s33, 0
      %p311 = por %p309, %p310
      %p312 = scmp.ne.s32.totalorder %s300, %s301
      %p313 = scmp.eq.s32.totalorder %s34, 1
      %p314 = por %p312, %p313
      %p316 = scmp.ne.s32.totalorder %s301, %s315
      %p317 = scmp.eq.s32.totalorder %s34, 0
      %p318 = por %p316, %p317
      %s320 = sadd.s32 %s319, 1
      %p323 = scmp.eq.s32.totalorder %s28, 1
      %p324 = scmp.ne.s32.totalorder %s319, %s321
      %p325 = scmp.eq.s32.totalorder %s28, 0
      %p326 = por %p324, %p325
      %p327 = scmp.ne.s32.totalorder %s319, %s321
      %p328 = scmp.eq.s32.totalorder %s33, 1
      %p329 = por %p327, %p328
      %p330 = scmp.ne.s32.totalorder %s321, %s322
      %p331 = scmp.eq.s32.totalorder %s33, 0
      %p332 = por %p330, %p331
      %p333 = scmp.ne.s32.totalorder %s321, %s322
      %p334 = scmp.eq.s32.totalorder %s34, 1
      %p335 = por %p333, %p334
      %p337 = scmp.ne.s32.totalorder %s322, %s336
      %p338 = scmp.eq.s32.totalorder %s34, 0
      %p339 = por %p337, %p338
      %s341 = sadd.s32 %s340, 1
      %p344 = scmp.eq.s32.totalorder %s28, 1
      %p345 = scmp.ne.s32.totalorder %s340, %s342
      %p346 = scmp.eq.s32.totalorder %s28, 0
      %p347 = por %p345, %p346
      %p348 = scmp.ne.s32.totalorder %s340, %s342
      %p349 = scmp.eq.s32.totalorder %s33, 1
      %p350 = por %p348, %p349
      %p351 = scmp.ne.s32.totalorder %s342, %s343
      %p352 = scmp.eq.s32.totalorder %s33, 0
      %p353 = por %p351, %p352
      %p354 = scmp.ne.s32.totalorder %s342, %s343
      %p355 = scmp.eq.s32.totalorder %s34, 1
      %p356 = por %p354, %p355
      %p358 = scmp.ne.s32.totalorder %s343, %s357
      %p359 = scmp.eq.s32.totalorder %s34, 0
      %p360 = por %p358, %p359
      %s362 = sadd.s32 %s361, 1
      %p365 = scmp.eq.s32.totalorder %s28, 1
      %p366 = scmp.ne.s32.totalorder %s361, %s363
      %p367 = scmp.eq.s32.totalorder %s28, 0
      %p368 = por %p366, %p367
      %p369 = scmp.ne.s32.totalorder %s361, %s363
      %p370 = scmp.eq.s32.totalorder %s33, 1
      %p371 = por %p369, %p370
      %p372 = scmp.ne.s32.totalorder %s363, %s364
      %p373 = scmp.eq.s32.totalorder %s33, 0
      %p374 = por %p372, %p373
      %p375 = scmp.ne.s32.totalorder %s363, %s364
      %p376 = scmp.eq.s32.totalorder %s34, 1
      %p377 = por %p375, %p376
      %p379 = scmp.ne.s32.totalorder %s364, %s378
      %p380 = scmp.eq.s32.totalorder %s34, 0
      %p381 = por %p379, %p380
      %s382 = ssub.s32 %s28, %s35
      %p383 = scmp.eq.s32.totalorder %s382, 0
      %s385 = sadd.s32 %s384, 1
      %s386 = scalar_select %p383, %s384, %s385
      %p389 = pneg %p383
      %p390 = scmp.eq.s32.totalorder %s28, 1
      %p391 = por %p389, %p390
      %p392 = scmp.ne.s32.totalorder %s384, %s387
      %p393 = scmp.eq.s32.totalorder %s28, 0
      %p394 = por %p392, %p393
      %p395 = scmp.ne.s32.totalorder %s384, %s387
      %p396 = scmp.eq.s32.totalorder %s33, 1
      %p397 = por %p395, %p396
      %p398 = scmp.ne.s32.totalorder %s387, %s388
      %p399 = scmp.eq.s32.totalorder %s33, 0
      %p400 = por %p398, %p399
      %p401 = scmp.ne.s32.totalorder %s387, %s388
      %p402 = scmp.eq.s32.totalorder %s34, 1
      %p403 = por %p401, %p402
      %p405 = scmp.ne.s32.totalorder %s388, %s404
      %p406 = scmp.eq.s32.totalorder %s34, 0
      %p407 = por %p405, %p406
      %p408 = scmp.le.s32.totalorder 1, %s28
      %p409 = scmp.lt.s32.totalorder %s28, 3
      %p410 = pnand %p408, %p409
      %p411 = pneg %p410
      // Predicated region
      $region9: #{_lambda_.1} parent=5 // pred_check
        _
      $region10: #{_lambda_.1} parent=5 // pred_check_branch
        %413 = sbr.rel (%p410) target = $region12
      $region11: #{_lambda_.1} parent=5 // pred_region
        %s414 = ssub.s32 %s28, 1
        // Predicated region
        $region13: #{_lambda_.1} parent=11 // pred_check
          %p415 = pneg %p101
        $region14: #{_lambda_.1} parent=11 // pred_check_branch
          %417 = sbr.rel (%p415) target = $region16
        $region15: #{_lambda_.1} parent=11 // pred_region
          _
        $region16: #{_lambda_.1} parent=11 // pred_fallthru
          _
        // Predicated region
        $region17: #{_lambda_.1} parent=11 // pred_check
          %p418 = pneg %p122
        $region18: #{_lambda_.1} parent=11 // pred_check_branch
          %420 = sbr.rel (%p418) target = $region20
        $region19: #{_lambda_.1} parent=11 // pred_region
          _
        $region20: #{_lambda_.1} parent=11 // pred_fallthru
          _
        // Predicated region
        $region21: #{_lambda_.1} parent=11 // pred_check
          %p421 = pneg %p143
        $region22: #{_lambda_.1} parent=11 // pred_check_branch
          %423 = sbr.rel (%p421) target = $region24
        $region23: #{_lambda_.1} parent=11 // pred_region
          _
        $region24: #{_lambda_.1} parent=11 // pred_fallthru
          _
        // Predicated region
        $region25: #{_lambda_.1} parent=11 // pred_check
          %p424 = pneg %p164
        $region26: #{_lambda_.1} parent=11 // pred_check_branch
          %426 = sbr.rel (%p424) target = $region28
        $region27: #{_lambda_.1} parent=11 // pred_region
          _
        $region28: #{_lambda_.1} parent=11 // pred_fallthru
          _
        // Predicated region
        $region29: #{_lambda_.1} parent=11 // pred_check
          %p427 = pneg %p185
        $region30: #{_lambda_.1} parent=11 // pred_check_branch
          %429 = sbr.rel (%p427) target = $region32
        $region31: #{_lambda_.1} parent=11 // pred_region
          _
        $region32: #{_lambda_.1} parent=11 // pred_fallthru
          _
        // Predicated region
        $region33: #{_lambda_.1} parent=11 // pred_check
          %p430 = pneg %p206
        $region34: #{_lambda_.1} parent=11 // pred_check_branch
          %432 = sbr.rel (%p430) target = $region36
        $region35: #{_lambda_.1} parent=11 // pred_region
          _
        $region36: #{_lambda_.1} parent=11 // pred_fallthru
          _
        // Predicated region
        $region37: #{_lambda_.1} parent=11 // pred_check
          %p433 = pneg %p227
        $region38: #{_lambda_.1} parent=11 // pred_check_branch
          %435 = sbr.rel (%p433) target = $region40
        $region39: #{_lambda_.1} parent=11 // pred_region
          _
        $region40: #{_lambda_.1} parent=11 // pred_fallthru
          _
        // Predicated region
        $region41: #{_lambda_.1} parent=11 // pred_check
          %p436 = pneg %p248
        $region42: #{_lambda_.1} parent=11 // pred_check_branch
          %438 = sbr.rel (%p436) target = $region44
        $region43: #{_lambda_.1} parent=11 // pred_region
          _
        $region44: #{_lambda_.1} parent=11 // pred_fallthru
          _
        // Predicated region
        $region45: #{_lambda_.1} parent=11 // pred_check
          %p439 = pneg %p269
        $region46: #{_lambda_.1} parent=11 // pred_check_branch
          %441 = sbr.rel (%p439) target = $region48
        $region47: #{_lambda_.1} parent=11 // pred_region
          _
        $region48: #{_lambda_.1} parent=11 // pred_fallthru
          _
        // Predicated region
        $region49: #{_lambda_.1} parent=11 // pred_check
          %p442 = pneg %p290
        $region50: #{_lambda_.1} parent=11 // pred_check_branch
          %444 = sbr.rel (%p442) target = $region52
        $region51: #{_lambda_.1} parent=11 // pred_region
          _
        $region52: #{_lambda_.1} parent=11 // pred_fallthru
          _
        // Predicated region
        $region53: #{_lambda_.1} parent=11 // pred_check
          %p445 = pneg %p311
        $region54: #{_lambda_.1} parent=11 // pred_check_branch
          %447 = sbr.rel (%p445) target = $region56
        $region55: #{_lambda_.1} parent=11 // pred_region
          _
        $region56: #{_lambda_.1} parent=11 // pred_fallthru
          _
        // Predicated region
        $region57: #{_lambda_.1} parent=11 // pred_check
          %p448 = pneg %p332
        $region58: #{_lambda_.1} parent=11 // pred_check_branch
          %450 = sbr.rel (%p448) target = $region60
        $region59: #{_lambda_.1} parent=11 // pred_region
          _
        $region60: #{_lambda_.1} parent=11 // pred_fallthru
          _
        // Predicated region
        $region61: #{_lambda_.1} parent=11 // pred_check
          %p451 = pneg %p353
        $region62: #{_lambda_.1} parent=11 // pred_check_branch
          %453 = sbr.rel (%p451) target = $region64
        $region63: #{_lambda_.1} parent=11 // pred_region
          _
        $region64: #{_lambda_.1} parent=11 // pred_fallthru
          _
        // Predicated region
        $region65: #{_lambda_.1} parent=11 // pred_check
          %p454 = pneg %p374
        $region66: #{_lambda_.1} parent=11 // pred_check_branch
          %456 = sbr.rel (%p454) target = $region68
        $region67: #{_lambda_.1} parent=11 // pred_region
          _
        $region68: #{_lambda_.1} parent=11 // pred_fallthru
          _
      $region12: #{_lambda_.1} parent=5 // pred_fallthru
        _
      %p457 = scmp.lt.s32.totalorder %s28, 2
      // Predicated region
      $region69: #{_lambda_.1} parent=5 // pred_check
        %p458 = pneg %p457
      $region70: #{_lambda_.1} parent=5 // pred_check_branch
        %460 = sbr.rel (%p458) target = $region72
      $region71: #{_lambda_.1} parent=5 // pred_region
        // Predicated region
        $region73: #{_lambda_.1} parent=71 // pred_check
          %p461 = pneg %p48
        $region74: #{_lambda_.1} parent=71 // pred_check_branch
          %463 = sbr.rel (%p461) target = $region76
        $region75: #{_lambda_.1} parent=71 // pred_region
          %s464 = sand.u32 %s38, 1
          %s465 = scalar_lea.sflag [#allocation3], %s464
          %s466 = sand.u32 %s38, 1
          %s467 = smul.addr %s466, 8
          %s468 = scalar_lea.vmem [#allocation2], %s467
          %470 = vsyncadd %s465, 0
          %s471 = smul.addr %s28, 8
          %s472 = scalar_lea.hbm %s0, %s471
          %s474 = sshll.u32 %s472, 4
          %s475 = int_to_ptr.hbm [resolvable:$true] %s474
          %s476 = sshll.u32 %s468, 4
          %s477 = int_to_ptr.vmem [resolvable:$true] %s476
          %479 = dma.hbm_to_vmem [thread:$0]  %s475, 128, %s477, %s465
        $region76: #{_lambda_.1} parent=71 // pred_fallthru
          _
        // Predicated region
        $region77: #{_lambda_.1} parent=71 // pred_check
          %p480 = pneg %p74
        $region78: #{_lambda_.1} parent=71 // pred_check_branch
          %482 = sbr.rel (%p480) target = $region80
        $region79: #{_lambda_.1} parent=71 // pred_region
          %p483 = scmp.lt.s32.totalorder %s28, 1
          %s484 = scalar_select %p483, %s28, 1
          %s485 = scalar_lea.vmem %s1, %s484
        $region80: #{_lambda_.1} parent=71 // pred_fallthru
          _
      $region72: #{_lambda_.1} parent=5 // pred_fallthru
        _
      %p486 = scmp.le.s32.totalorder 1, %s28
      %p487 = scmp.lt.s32.totalorder %s28, 3
      %p488 = pnand %p486, %p487
      %p489 = pneg %p488
      // Predicated region
      $region81: #{_lambda_.1} parent=5 // pred_check
        _
      $region82: #{_lambda_.1} parent=5 // pred_check_branch
        %491 = sbr.rel (%p488) target = $region84
      $region83: #{_lambda_.1} parent=5 // pred_region
        %s492 = ssub.s32 %s28, 1
        %s493 = sand.u32 %s41, 1
        %s494 = scalar_lea.sflag [#allocation3], %s493
        %s495 = sand.u32 %s41, 1
        %s496 = smul.addr %s495, 8
        %s497 = scalar_lea.vmem [#allocation2], %s496
        // Predicated region
        $region85: #{_lambda_.1} parent=83 // pred_check
          %p498 = pneg %p54
        $region86: #{_lambda_.1} parent=83 // pred_check_branch
          %500 = sbr.rel (%p498) target = $region88
        $region87: #{_lambda_.1} parent=83 // pred_region
          %502 = dma.done %s494, 128
        $region88: #{_lambda_.1} parent=83 // pred_fallthru
          _
        %s503 = sand.u32 %s41, 1
        %s504 = scalar_lea.sflag [#allocation3], %s503
        %s505 = sand.u32 %s41, 1
        %s506 = smul.addr %s505, 8
        %s507 = scalar_lea.vmem [#allocation2], %s506
        %p508 = pneg %p54
        %p509 = pneg %p51
        %p510 = scmp.lt.s32.totalorder %s33, 1
        %s511 = scalar_select %p510, %s33, 1
        %s512 = scalar_lea.vmem %s1, %s511
        %p513 = pneg %p80
        %p514 = pneg %p77
        %p515 = pneg %p101
        %p516 = pneg %p98
        %p517 = pneg %p122
        %p518 = pneg %p119
        %p519 = pneg %p143
        %p520 = pneg %p140
        %p521 = pneg %p164
        %p522 = pneg %p161
        %p523 = pneg %p185
        %p524 = pneg %p182
        %p525 = pneg %p206
        %p526 = pneg %p203
        %p527 = pneg %p227
        %p528 = pneg %p224
        %p529 = pneg %p248
        %p530 = pneg %p245
        %p531 = pneg %p269
        %p532 = pneg %p266
        %p533 = pneg %p290
        %p534 = pneg %p287
        %p535 = pneg %p311
        %p536 = pneg %p308
        %p537 = pneg %p332
        %p538 = pneg %p329
        %p539 = pneg %p353
        %p540 = pneg %p350
        %p541 = pneg %p374
        %p542 = pneg %p371
        %p543 = pneg %p400
        %p544 = pneg %p397
        %s545 = sand.u32 %s387, 1
        %s546 = scalar_lea.sflag [#allocation4], %s545
        %s547 = sand.u32 %s387, 1
        %s548 = smul.addr %s547, 8
        %s549 = scalar_lea.vmem [#allocation5], %s548
        %p550 = scmp.lt.s32.totalorder %s33, 1
        %s551 = scalar_select %p550, %s33, 1
        %s552 = scalar_lea.vmem %s1, %s551
        %v554 = vld [vmem:[%s497] sm:$0xff]
        %v555 = vld [vmem:[%s552] sm:$0x1]
        %vm556 = vcmp.eq.f32.partialorder %v555, 0.0
        %v557 = vsel %vm556, -1e+09, 0.0
        %v558 = vld [vmem:[%s10] sm:$0x1]
        %v559 = vld [vmem:[%s11] sm:$0x1]
        %vm560 = vcmask 261120
        %v561 = vsel %vm560, %v554, 0.0
        %562 = vadd.xlane.f32.xlu0 %v561
        %v563 = vpop.xlane.xlu0 %562
        %v564 = vrcp.pop 32.0
        %v565 = vmul.f32 32.0, %v564
        %v566 = vsub.f32 1.0, %v565
        %v567 = vmul.f32 %v564, %v566
        %v568 = vadd.f32 %v564, %v567
        %vm569 = vweird.f32 %v564
        %v570 = vsel %vm569, %v564, %v568
        %v571 = vmul.f32 %v563, %v570
        %v572 = vsub.f32 %v554, %v571
        %v573 = vmul.f32 %v572, %v572
        %v574 = vsel %vm560, %v573, 0.0
        %575 = vadd.xlane.f32.xlu0 %v574
        %v576 = vpop.xlane.xlu0 %575
        %v577 = vmul.f32 %v576, 0.032258064
        %v579 = vperm.slane %v558, 0
        %v581 = vmul.f32 %v579, %v572
        %v582 = vrsqrt.pop %v577
        %v583 = vmul.f32 %v582, %v577
        %v584 = vmul.f32 %v583, %v582
        %v585 = vmul.f32 0.5, %v584
        %v586 = vsub.f32 1.5, %v585
        %v587 = vmul.f32 %v582, %v586
        %v588 = vmul.f32 %v577, %v587
        %vm589 = vcmp.eq.f32.partialorder %v577, inf
        %v590 = vsel %vm589, %v577, %v588
        %vm591 = vcmp.eq.f32.partialorder %v577, 0.0
        %v592 = vand.u32 %v577, 2147483648
        %v593 = vsel %vm591, %v592, %v590
        %v594 = vadd.f32 %v593, 1e-06
        %v595 = vrcp.pop %v594
        %v596 = vmul.f32 %v594, %v595
        %v597 = vsub.f32 1.0, %v596
        %v598 = vmul.f32 %v595, %v597
        %v599 = vadd.f32 %v595, %v598
        %vm600 = vweird.f32 %v594
        %vm601 = vweird.f32 %v595
        %vm602 = vmor %vm600, %vm601
        %v603 = vsel %vm602, %v595, %v599
        %v604 = vand.u32 2147483647, %v594
        %vm605 = vcmp.eq.f32.partialorder %v604, 8.507059e+37
        %v606 = vand.u32 %v594, 2147483648
        %v607 = vor.u32 1.1754944e-38, %v606
        %v608 = vsel %vm605, %v607, %v603
        %v609 = vmul.f32 %v581, %v608
        %v611 = vperm.slane %v559, 0
        %v613 = vadd.f32 %v609, %v611
        %v614 = vpack.c.bf16 %v613, %v613
        %v615 = vld [vmem:[%s2] sm:$0xf]
        %v616 = vld [vmem:[%s2 + $0x4] sm:$0xf]
        %v617 = vld [vmem:[%s2 + $0x8] sm:$0xf]
        %v618 = vld [vmem:[%s2 + $0xc] sm:$0xf]
        %v619 = vld [vmem:[%s3] sm:$0x1]
        %v621 = vperm.slane %v619, 0
        %v627 = vunpack.c.l.b16 %v615
        %v628 = vunpack.c.l.b16 %v616
        %v629 = vunpack.c.l.b16 %v617
        %v630 = vunpack.c.l.b16 %v618
        %v631 = vpack.c.b16 %v628, %v627
        %v632 = vpack.c.b16 %v630, %v629
        %v636 = vsel %vm560, %v614, 0
        %638 = vmatpush.bf16.msra.mxu0 0
        %639 = vmatpush.bf16.msra.mxu0 0
        %640 = vmatpush.bf16.msra.mxu0 0
        %641 = vmatpush.bf16.msra.mxu0 0
        %642 = vmatpush.bf16.msra.mxu0 0
        %643 = vmatpush.bf16.msra.mxu0 0
        %644 = vmatpush.bf16.msra.mxu0 %v632
        %645 = vmatpush.bf16.msra.mxu0 %v631
        %646 = vmatmul.bf16.gmra.mxu0 %v636
        %v647 = vpop.f32.mrf.mxu0
        %v648 = vadd.f32 %v621, %v647
        %v649 = vpop.f32.mrf.mxu0
        %650 = vdwg.mxu0
        %v651 = vld [vmem:[%s4] sm:$0xf]
        %v652 = vld [vmem:[%s4 + $0x4] sm:$0xf]
        %v653 = vld [vmem:[%s4 + $0x8] sm:$0xf]
        %v654 = vld [vmem:[%s4 + $0xc] sm:$0xf]
        %v655 = vmul.f32 %v648, 0.35355338
        %v656 = vpack.c.bf16 %v655, %v655
        %v657 = vpack.c.bf16 %v648, %v648
        %v659 = vperm.slane %v557, 0
        %662 = vrot.lane.b32.xlu0 %v657, 96
        %v663 = vpop.permute.xlu0 %662
        %vm664 = vcmask 64512
        %v666 = vsel %vm664, %v656, 0
        %v669 = vsel %vm664, %v663, 0
        %671 = vmatpush.bf16.xpose.msra.mxu0 0
        %672 = vmatpush.bf16.xpose.msra.mxu0 0
        %673 = vmatpush.bf16.xpose.msra.mxu0 0
        %674 = vmatpush.bf16.xpose.msra.mxu0 0
        %675 = vmatpush.bf16.xpose.msra.mxu0 0
        %676 = vmatpush.bf16.xpose.msra.mxu0 0
        %677 = vmatpush.bf16.xpose.msra.mxu0 0
        %678 = vmatpush.bf16.xpose.msra.mxu0 %v669
        %679 = vmatmul.bf16.gmra.mxu0 %v666
        %v680 = vpop.f32.mrf.mxu0
        %v681 = vadd.f32 %v659, %v680
        %v682 = vpop.f32.mrf.mxu0
        %683 = vdwg.mxu0
        %v684 = vsel %vm664, %v681, -inf
        %685 = vmax.xlane.f32.xlu0 %v684
        %v686 = vpop.xlane.xlu0 %685
        %v687 = vsub.f32 %v681, %v686
        %v688 = vmul.f32 %v687, 1.442695
        %v689 = vpow.pop %v688
        %v690 = vsel %vm664, %v689, 0.0
        %691 = vadd.xlane.f32.xlu0 %v690
        %v692 = vpop.xlane.xlu0 %691
        %v693 = vrcp.pop %v692
        %v694 = vmul.f32 %v689, %v693
        %v695 = vpack.c.bf16 %v694, %v694
        %696 = vrot.lane.b32.xlu0 %v657, 64
        %v697 = vpop.permute.xlu0 %696
        %v699 = vsel %vm664, %v695, 0
        %vm701 = vcmask 1043456
        %v703 = vsel %vm701, %v697, 0
        %705 = vmatpush.bf16.msra.mxu0 0
        %706 = vmatpush.bf16.msra.mxu0 0
        %707 = vmatpush.bf16.msra.mxu0 0
        %708 = vmatpush.bf16.msra.mxu0 0
        %709 = vmatpush.bf16.msra.mxu0 0
        %710 = vmatpush.bf16.msra.mxu0 0
        %711 = vmatpush.bf16.msra.mxu0 0
        %712 = vmatpush.bf16.msra.mxu0 %v703
        %713 = vmatmul.bf16.gmra.mxu0 %v699
        %v714 = vpop.f32.mrf.mxu0
        %v715 = vadd.f32 0.0, %v714
        %v716 = vpop.f32.mrf.mxu0
        %717 = vdwg.mxu0
        %v718 = vpack.c.bf16 %v715, %v715
        %720 = vrot.lane.b32.xlu0 %v656, 120
        %v721 = vpop.permute.xlu0 %720
        %722 = vrot.lane.b32.xlu0 %v657, 88
        %v723 = vpop.permute.xlu0 %722
        %v725 = vsel %vm664, %v721, 0
        %v728 = vsel %vm664, %v723, 0
        %730 = vmatpush.bf16.xpose.msra.mxu0 0
        %731 = vmatpush.bf16.xpose.msra.mxu0 0
        %732 = vmatpush.bf16.xpose.msra.mxu0 0
        %733 = vmatpush.bf16.xpose.msra.mxu0 0
        %734 = vmatpush.bf16.xpose.msra.mxu0 0
        %735 = vmatpush.bf16.xpose.msra.mxu0 0
        %736 = vmatpush.bf16.xpose.msra.mxu0 0
        %737 = vmatpush.bf16.xpose.msra.mxu0 %v728
        %738 = vmatmul.bf16.gmra.mxu0 %v725
        %v739 = vpop.f32.mrf.mxu0
        %v740 = vadd.f32 %v659, %v739
        %v741 = vpop.f32.mrf.mxu0
        %742 = vdwg.mxu0
        %v743 = vsel %vm664, %v740, -inf
        %744 = vmax.xlane.f32.xlu0 %v743
        %v745 = vpop.xlane.xlu0 %744
        %v746 = vsub.f32 %v740, %v745
        %v747 = vmul.f32 %v746, 1.442695
        %v748 = vpow.pop %v747
        %v749 = vsel %vm664, %v748, 0.0
        %750 = vadd.xlane.f32.xlu0 %v749
        %v751 = vpop.xlane.xlu0 %750
        %v752 = vrcp.pop %v751
        %v753 = vmul.f32 %v748, %v752
        %v754 = vpack.c.bf16 %v753, %v753
        %755 = vrot.lane.b32.xlu0 %v657, 56
        %v756 = vpop.permute.xlu0 %755
        %v758 = vsel %vm664, %v754, 0
        %v761 = vsel %vm701, %v756, 0
        %763 = vmatpush.bf16.msra.mxu0 0
        %764 = vmatpush.bf16.msra.mxu0 0
        %765 = vmatpush.bf16.msra.mxu0 0
        %766 = vmatpush.bf16.msra.mxu0 0
        %767 = vmatpush.bf16.msra.mxu0 0
        %768 = vmatpush.bf16.msra.mxu0 0
        %769 = vmatpush.bf16.msra.mxu0 0
        %770 = vmatpush.bf16.msra.mxu0 %v761
        %771 = vmatmul.bf16.gmra.mxu0 %v758
        %v772 = vpop.f32.mrf.mxu0
        %v773 = vadd.f32 0.0, %v772
        %v774 = vpop.f32.mrf.mxu0
        %775 = vdwg.mxu0
        %v776 = vpack.c.bf16 %v773, %v773
        %v778 = vsel %vm664, %v776, 0
        %v781 = vsel %vm701, %v652, 0
        %783 = vmatpush.bf16.msra.mxu0 0
        %784 = vmatpush.bf16.msra.mxu0 0
        %785 = vmatpush.bf16.msra.mxu0 0
        %786 = vmatpush.bf16.msra.mxu0 0
        %787 = vmatpush.bf16.msra.mxu0 0
        %788 = vmatpush.bf16.msra.mxu0 0
        %789 = vmatpush.bf16.msra.mxu0 0
        %790 = vmatpush.bf16.msra.mxu0 %v781
        %791 = vmatmul.bf16.gmra.mxu0 %v778
        %v792 = vpop.f32.mrf.mxu0
        %v793 = vadd.f32 0.0, %v792
        %v794 = vpop.f32.mrf.mxu0
        %795 = vdwg.mxu0
        %v797 = vsel %vm664, %v718, 0
        %v800 = vsel %vm701, %v651, 0
        %802 = vmatpush.bf16.msra.mxu0 0
        %803 = vmatpush.bf16.msra.mxu0 0
        %804 = vmatpush.bf16.msra.mxu0 0
        %805 = vmatpush.bf16.msra.mxu0 0
        %806 = vmatpush.bf16.msra.mxu0 0
        %807 = vmatpush.bf16.msra.mxu0 0
        %808 = vmatpush.bf16.msra.mxu0 0
        %809 = vmatpush.bf16.msra.mxu0 %v800
        %810 = vmatmul.bf16.gmra.mxu0 %v797
        %v811 = vpop.f32.mrf.mxu0
        %v812 = vadd.f32 %v793, %v811
        %v813 = vpop.f32.mrf.mxu0
        %814 = vdwg.mxu0
        %815 = vrot.lane.b32.xlu0 %v656, 112
        %v816 = vpop.permute.xlu0 %815
        %817 = vrot.lane.b32.xlu0 %v657, 80
        %v818 = vpop.permute.xlu0 %817
        %v820 = vsel %vm664, %v816, 0
        %v823 = vsel %vm664, %v818, 0
        %825 = vmatpush.bf16.xpose.msra.mxu0 0
        %826 = vmatpush.bf16.xpose.msra.mxu0 0
        %827 = vmatpush.bf16.xpose.msra.mxu0 0
        %828 = vmatpush.bf16.xpose.msra.mxu0 0
        %829 = vmatpush.bf16.xpose.msra.mxu0 0
        %830 = vmatpush.bf16.xpose.msra.mxu0 0
        %831 = vmatpush.bf16.xpose.msra.mxu0 0
        %832 = vmatpush.bf16.xpose.msra.mxu0 %v823
        %833 = vmatmul.bf16.gmra.mxu0 %v820
        %v834 = vpop.f32.mrf.mxu0
        %v835 = vadd.f32 %v659, %v834
        %v836 = vpop.f32.mrf.mxu0
        %837 = vdwg.mxu0
        %v838 = vsel %vm664, %v835, -inf
        %839 = vmax.xlane.f32.xlu0 %v838
        %v840 = vpop.xlane.xlu0 %839
        %v841 = vsub.f32 %v835, %v840
        %v842 = vmul.f32 %v841, 1.442695
        %v843 = vpow.pop %v842
        %v844 = vsel %vm664, %v843, 0.0
        %845 = vadd.xlane.f32.xlu0 %v844
        %v846 = vpop.xlane.xlu0 %845
        %v847 = vrcp.pop %v846
        %v848 = vmul.f32 %v843, %v847
        %v849 = vpack.c.bf16 %v848, %v848
        %850 = vrot.lane.b32.xlu0 %v657, 48
        %v851 = vpop.permute.xlu0 %850
        %v853 = vsel %vm664, %v849, 0
        %v856 = vsel %vm701, %v851, 0
        %858 = vmatpush.bf16.msra.mxu0 0
        %859 = vmatpush.bf16.msra.mxu0 0
        %860 = vmatpush.bf16.msra.mxu0 0
        %861 = vmatpush.bf16.msra.mxu0 0
        %862 = vmatpush.bf16.msra.mxu0 0
        %863 = vmatpush.bf16.msra.mxu0 0
        %864 = vmatpush.bf16.msra.mxu0 0
        %865 = vmatpush.bf16.msra.mxu0 %v856
        %866 = vmatmul.bf16.gmra.mxu0 %v853
        %v867 = vpop.f32.mrf.mxu0
        %v868 = vadd.f32 0.0, %v867
        %v869 = vpop.f32.mrf.mxu0
        %870 = vdwg.mxu0
        %v871 = vpack.c.bf16 %v868, %v868
        %v873 = vsel %vm664, %v871, 0
        %v876 = vsel %vm701, %v653, 0
        %878 = vmatpush.bf16.msra.mxu0 0
        %879 = vmatpush.bf16.msra.mxu0 0
        %880 = vmatpush.bf16.msra.mxu0 0
        %881 = vmatpush.bf16.msra.mxu0 0
        %882 = vmatpush.bf16.msra.mxu0 0
        %883 = vmatpush.bf16.msra.mxu0 0
        %884 = vmatpush.bf16.msra.mxu0 0
        %885 = vmatpush.bf16.msra.mxu0 %v876
        %886 = vmatmul.bf16.gmra.mxu0 %v873
        %v887 = vpop.f32.mrf.mxu0
        %v888 = vadd.f32 0.0, %v887
        %v889 = vpop.f32.mrf.mxu0
        %890 = vdwg.mxu0
        %v891 = vadd.f32 %v812, %v888
        %892 = vrot.lane.b32.xlu0 %v656, 104
        %v893 = vpop.permute.xlu0 %892
        %894 = vrot.lane.b32.xlu0 %v657, 72
        %v895 = vpop.permute.xlu0 %894
        %v897 = vsel %vm664, %v893, 0
        %v900 = vsel %vm664, %v895, 0
        %902 = vmatpush.bf16.xpose.msra.mxu0 0
        %903 = vmatpush.bf16.xpose.msra.mxu0 0
        %904 = vmatpush.bf16.xpose.msra.mxu0 0
        %905 = vmatpush.bf16.xpose.msra.mxu0 0
        %906 = vmatpush.bf16.xpose.msra.mxu0 0
        %907 = vmatpush.bf16.xpose.msra.mxu0 0
        %908 = vmatpush.bf16.xpose.msra.mxu0 0
        %909 = vmatpush.bf16.xpose.msra.mxu0 %v900
        %910 = vmatmul.bf16.gmra.mxu0 %v897
        %v911 = vpop.f32.mrf.mxu0
        %v912 = vadd.f32 %v659, %v911
        %v913 = vpop.f32.mrf.mxu0
        %914 = vdwg.mxu0
        %v915 = vsel %vm664, %v912, -inf
        %916 = vmax.xlane.f32.xlu0 %v915
        %v917 = vpop.xlane.xlu0 %916
        %v918 = vsub.f32 %v912, %v917
        %v919 = vmul.f32 %v918, 1.442695
        %v920 = vpow.pop %v919
        %v921 = vsel %vm664, %v920, 0.0
        %922 = vadd.xlane.f32.xlu0 %v921
        %v923 = vpop.xlane.xlu0 %922
        %v924 = vrcp.pop %v923
        %v925 = vmul.f32 %v920, %v924
        %v926 = vpack.c.bf16 %v925, %v925
        %927 = vrot.lane.b32.xlu0 %v657, 40
        %v928 = vpop.permute.xlu0 %927
        %v930 = vsel %vm664, %v926, 0
        %v933 = vsel %vm701, %v928, 0
        %935 = vmatpush.bf16.msra.mxu0 0
        %936 = vmatpush.bf16.msra.mxu0 0
        %937 = vmatpush.bf16.msra.mxu0 0
        %938 = vmatpush.bf16.msra.mxu0 0
        %939 = vmatpush.bf16.msra.mxu0 0
        %940 = vmatpush.bf16.msra.mxu0 0
        %941 = vmatpush.bf16.msra.mxu0 0
        %942 = vmatpush.bf16.msra.mxu0 %v933
        %943 = vmatmul.bf16.gmra.mxu0 %v930
        %v944 = vpop.f32.mrf.mxu0
        %v945 = vadd.f32 0.0, %v944
        %v946 = vpop.f32.mrf.mxu0
        %947 = vdwg.mxu0
        %v948 = vpack.c.bf16 %v945, %v945
        %v950 = vsel %vm664, %v948, 0
        %v953 = vsel %vm701, %v654, 0
        %955 = vmatpush.bf16.msra.mxu0 0
        %956 = vmatpush.bf16.msra.mxu0 0
        %957 = vmatpush.bf16.msra.mxu0 0
        %958 = vmatpush.bf16.msra.mxu0 0
        %959 = vmatpush.bf16.msra.mxu0 0
        %960 = vmatpush.bf16.msra.mxu0 0
        %961 = vmatpush.bf16.msra.mxu0 0
        %962 = vmatpush.bf16.msra.mxu0 %v953
        %963 = vmatmul.bf16.gmra.mxu0 %v950
        %v964 = vpop.f32.mrf.mxu0
        %v965 = vadd.f32 0.0, %v964
        %v966 = vpop.f32.mrf.mxu0
        %967 = vdwg.mxu0
        %v968 = vadd.f32 %v891, %v965
        %v969 = vadd.f32 %v554, %v968
        %v970 = vld [vmem:[%s5] sm:$0x1]
        %v972 = vperm.slane %v970, 0
        %v974 = vadd.f32 %v969, %v972
        %v975 = vld [vmem:[%s12] sm:$0x1]
        %v976 = vld [vmem:[%s13] sm:$0x1]
        %v977 = vsel %vm560, %v974, 0.0
        %978 = vadd.xlane.f32.xlu0 %v977
        %v979 = vpop.xlane.xlu0 %978
        %v980 = vmul.f32 %v979, %v570
        %v981 = vsub.f32 %v974, %v980
        %v982 = vmul.f32 %v981, %v981
        %v983 = vsel %vm560, %v982, 0.0
        %984 = vadd.xlane.f32.xlu0 %v983
        %v985 = vpop.xlane.xlu0 %984
        %v986 = vmul.f32 %v985, 0.032258064
        %v988 = vperm.slane %v975, 0
        %v990 = vmul.f32 %v988, %v981
        %v991 = vrsqrt.pop %v986
        %v992 = vmul.f32 %v991, %v986
        %v993 = vmul.f32 %v992, %v991
        %v994 = vmul.f32 0.5, %v993
        %v995 = vsub.f32 1.5, %v994
        %v996 = vmul.f32 %v991, %v995
        %v997 = vmul.f32 %v986, %v996
        %vm998 = vcmp.eq.f32.partialorder %v986, inf
        %v999 = vsel %vm998, %v986, %v997
        %vm1000 = vcmp.eq.f32.partialorder %v986, 0.0
        %v1001 = vand.u32 %v986, 2147483648
        %v1002 = vsel %vm1000, %v1001, %v999
        %v1003 = vadd.f32 %v1002, 1e-06
        %v1004 = vrcp.pop %v1003
        %v1005 = vmul.f32 %v1003, %v1004
        %v1006 = vsub.f32 1.0, %v1005
        %v1007 = vmul.f32 %v1004, %v1006
        %v1008 = vadd.f32 %v1004, %v1007
        %vm1009 = vweird.f32 %v1003
        %vm1010 = vweird.f32 %v1004
        %vm1011 = vmor %vm1009, %vm1010
        %v1012 = vsel %vm1011, %v1004, %v1008
        %v1013 = vand.u32 2147483647, %v1003
        %vm1014 = vcmp.eq.f32.partialorder %v1013, 8.507059e+37
        %v1015 = vand.u32 %v1003, 2147483648
        %v1016 = vor.u32 1.1754944e-38, %v1015
        %v1017 = vsel %vm1014, %v1016, %v1012
        %v1018 = vmul.f32 %v990, %v1017
        %v1020 = vperm.slane %v976, 0
        %v1022 = vadd.f32 %v1018, %v1020
        %v1023 = vpack.c.bf16 %v1022, %v1022
        %v1024 = vld [vmem:[%s6] sm:$0xf]
        %v1025 = vld [vmem:[%s6 + $0x4] sm:$0xf]
        %v1026 = vld [vmem:[%s6 + $0x8] sm:$0xf]
        %v1027 = vld [vmem:[%s6 + $0xc] sm:$0xf]
        %v1028 = vld [vmem:[%s7] sm:$0x1]
        %v1030 = vperm.slane %v1028, 0
        %v1036 = vunpack.c.l.b16 %v1024
        %v1037 = vunpack.c.l.b16 %v1025
        %v1038 = vunpack.c.l.b16 %v1026
        %v1039 = vunpack.c.l.b16 %v1027
        %v1040 = vpack.c.b16 %v1037, %v1036
        %v1041 = vpack.c.b16 %v1039, %v1038
        %v1045 = vsel %vm560, %v1023, 0
        %1047 = vmatpush.bf16.msra.mxu0 0
        %1048 = vmatpush.bf16.msra.mxu0 0
        %1049 = vmatpush.bf16.msra.mxu0 0
        %1050 = vmatpush.bf16.msra.mxu0 0
        %1051 = vmatpush.bf16.msra.mxu0 0
        %1052 = vmatpush.bf16.msra.mxu0 0
        %1053 = vmatpush.bf16.msra.mxu0 %v1041
        %1054 = vmatpush.bf16.msra.mxu0 %v1040
        %1055 = vmatmul.bf16.gmra.mxu0 %v1045
        %v1056 = vpop.f32.mrf.mxu0
        %v1057 = vadd.f32 %v1030, %v1056
        %v1058 = vpop.f32.mrf.mxu0
        %1059 = vdwg.mxu0
        %v1060 = vmax.f32 %v1057, 0.0
        %v1061 = vpack.c.bf16 %v1060, %v1060
        %v1062 = vld [vmem:[%s8] sm:$0xf]
        %v1063 = vld [vmem:[%s8 + $0x4] sm:$0xf]
        %v1064 = vld [vmem:[%s8 + $0x8] sm:$0xf]
        %v1065 = vld [vmem:[%s8 + $0xc] sm:$0xf]
        %v1066 = vld [vmem:[%s8 + $0x10] sm:$0xf]
        %v1067 = vld [vmem:[%s8 + $0x14] sm:$0xf]
        %v1068 = vld [vmem:[%s8 + $0x18] sm:$0xf]
        %v1069 = vld [vmem:[%s8 + $0x1c] sm:$0xf]
        %v1070 = vld [vmem:[%s9] sm:$0x1]
        %v1072 = vperm.slane %v1070, 0
        %v1082 = vunpack.c.l.b16 %v1062
        %v1083 = vunpack.c.l.b16 %v1063
        %v1084 = vunpack.c.l.b16 %v1064
        %v1085 = vunpack.c.l.b16 %v1065
        %v1086 = vunpack.c.l.b16 %v1066
        %v1087 = vunpack.c.l.b16 %v1067
        %v1088 = vunpack.c.l.b16 %v1068
        %v1089 = vunpack.c.l.b16 %v1069
        %v1090 = vpack.c.b16 %v1083, %v1082
        %v1091 = vpack.c.b16 %v1085, %v1084
        %v1092 = vpack.c.b16 %v1087, %v1086
        %v1093 = vpack.c.b16 %v1089, %v1088
        %vm1098 = vcmask 523264
        %v1100 = vsel %vm1098, %v1061, 0
        %1102 = vmatpush.bf16.msra.mxu0 0
        %1103 = vmatpush.bf16.msra.mxu0 0
        %1104 = vmatpush.bf16.msra.mxu0 0
        %1105 = vmatpush.bf16.msra.mxu0 0
        %1106 = vmatpush.bf16.msra.mxu0 %v1093
        %1107 = vmatpush.bf16.msra.mxu0 %v1092
        %1108 = vmatpush.bf16.msra.mxu0 %v1091
        %1109 = vmatpush.bf16.msra.mxu0 %v1090
        %1110 = vmatmul.bf16.gmra.mxu0 %v1100
        %v1111 = vpop.f32.mrf.mxu0
        %v1112 = vadd.f32 %v1072, %v1111
        %v1113 = vpop.f32.mrf.mxu0
        %1114 = vdwg.mxu0
        %v1115 = vadd.f32 %v974, %v1112
        %s1116 = scalar_lea.vmem %s10, 1
        %v1117 = vld [vmem:[%s1116] sm:$0x1]
        %s1118 = scalar_lea.vmem %s11, 1
        %v1119 = vld [vmem:[%s1118] sm:$0x1]
        %v1120 = vsel %vm560, %v1115, 0.0
        %1121 = vadd.xlane.f32.xlu0 %v1120
        %v1122 = vpop.xlane.xlu0 %1121
        %v1123 = vmul.f32 %v1122, %v570
        %v1124 = vsub.f32 %v1115, %v1123
        %v1125 = vmul.f32 %v1124, %v1124
        %v1126 = vsel %vm560, %v1125, 0.0
        %1127 = vadd.xlane.f32.xlu0 %v1126
        %v1128 = vpop.xlane.xlu0 %1127
        %v1129 = vmul.f32 %v1128, 0.032258064
        %v1131 = vperm.slane %v1117, 0
        %v1133 = vmul.f32 %v1131, %v1124
        %v1134 = vrsqrt.pop %v1129
        %v1135 = vmul.f32 %v1134, %v1129
        %v1136 = vmul.f32 %v1135, %v1134
        %v1137 = vmul.f32 0.5, %v1136
        %v1138 = vsub.f32 1.5, %v1137
        %v1139 = vmul.f32 %v1134, %v1138
        %v1140 = vmul.f32 %v1129, %v1139
        %vm1141 = vcmp.eq.f32.partialorder %v1129, inf
        %v1142 = vsel %vm1141, %v1129, %v1140
        %vm1143 = vcmp.eq.f32.partialorder %v1129, 0.0
        %v1144 = vand.u32 %v1129, 2147483648
        %v1145 = vsel %vm1143, %v1144, %v1142
        %v1146 = vadd.f32 %v1145, 1e-06
        %v1147 = vrcp.pop %v1146
        %v1148 = vmul.f32 %v1146, %v1147
        %v1149 = vsub.f32 1.0, %v1148
        %v1150 = vmul.f32 %v1147, %v1149
        %v1151 = vadd.f32 %v1147, %v1150
        %vm1152 = vweird.f32 %v1146
        %vm1153 = vweird.f32 %v1147
        %vm1154 = vmor %vm1152, %vm1153
        %v1155 = vsel %vm1154, %v1147, %v1151
        %v1156 = vand.u32 2147483647, %v1146
        %vm1157 = vcmp.eq.f32.partialorder %v1156, 8.507059e+37
        %v1158 = vand.u32 %v1146, 2147483648
        %v1159 = vor.u32 1.1754944e-38, %v1158
        %v1160 = vsel %vm1157, %v1159, %v1155
        %v1161 = vmul.f32 %v1133, %v1160
        %v1163 = vperm.slane %v1119, 0
        %v1165 = vadd.f32 %v1161, %v1163
        %v1166 = vpack.c.bf16 %v1165, %v1165
        %s1167 = scalar_lea.vmem %s2, 16
        %v1168 = vld [vmem:[%s1167] sm:$0xf]
        %v1169 = vld [vmem:[%s1167 + $0x4] sm:$0xf]
        %v1170 = vld [vmem:[%s1167 + $0x8] sm:$0xf]
        %v1171 = vld [vmem:[%s1167 + $0xc] sm:$0xf]
        %s1172 = scalar_lea.vmem %s3, 1
        %v1173 = vld [vmem:[%s1172] sm:$0x1]
        %v1175 = vperm.slane %v1173, 0
        %v1181 = vunpack.c.l.b16 %v1168
        %v1182 = vunpack.c.l.b16 %v1169
        %v1183 = vunpack.c.l.b16 %v1170
        %v1184 = vunpack.c.l.b16 %v1171
        %v1185 = vpack.c.b16 %v1182, %v1181
        %v1186 = vpack.c.b16 %v1184, %v1183
        %v1190 = vsel %vm560, %v1166, 0
        %1192 = vmatpush.bf16.msra.mxu0 0
        %1193 = vmatpush.bf16.msra.mxu0 0
        %1194 = vmatpush.bf16.msra.mxu0 0
        %1195 = vmatpush.bf16.msra.mxu0 0
        %1196 = vmatpush.bf16.msra.mxu0 0
        %1197 = vmatpush.bf16.msra.mxu0 0
        %1198 = vmatpush.bf16.msra.mxu0 %v1186
        %1199 = vmatpush.bf16.msra.mxu0 %v1185
        %1200 = vmatmul.bf16.gmra.mxu0 %v1190
        %v1201 = vpop.f32.mrf.mxu0
        %v1202 = vadd.f32 %v1175, %v1201
        %v1203 = vpop.f32.mrf.mxu0
        %1204 = vdwg.mxu0
        %s1205 = scalar_lea.vmem %s4, 16
        %v1206 = vld [vmem:[%s1205] sm:$0xf]
        %v1207 = vld [vmem:[%s1205 + $0x4] sm:$0xf]
        %v1208 = vld [vmem:[%s1205 + $0x8] sm:$0xf]
        %v1209 = vld [vmem:[%s1205 + $0xc] sm:$0xf]
        %v1210 = vmul.f32 %v1202, 0.35355338
        %v1211 = vpack.c.bf16 %v1210, %v1210
        %v1212 = vpack.c.bf16 %v1202, %v1202
        %1214 = vrot.lane.b32.xlu0 %v1212, 96
        %v1215 = vpop.permute.xlu0 %1214
        %v1217 = vsel %vm664, %v1211, 0
        %v1220 = vsel %vm664, %v1215, 0
        %1222 = vmatpush.bf16.xpose.msra.mxu0 0
        %1223 = vmatpush.bf16.xpose.msra.mxu0 0
        %1224 = vmatpush.bf16.xpose.msra.mxu0 0
        %1225 = vmatpush.bf16.xpose.msra.mxu0 0
        %1226 = vmatpush.bf16.xpose.msra.mxu0 0
        %1227 = vmatpush.bf16.xpose.msra.mxu0 0
        %1228 = vmatpush.bf16.xpose.msra.mxu0 0
        %1229 = vmatpush.bf16.xpose.msra.mxu0 %v1220
        %1230 = vmatmul.bf16.gmra.mxu0 %v1217
        %v1231 = vpop.f32.mrf.mxu0
        %v1232 = vadd.f32 %v659, %v1231
        %v1233 = vpop.f32.mrf.mxu0
        %1234 = vdwg.mxu0
        %v1235 = vsel %vm664, %v1232, -inf
        %1236 = vmax.xlane.f32.xlu0 %v1235
        %v1237 = vpop.xlane.xlu0 %1236
        %v1238 = vsub.f32 %v1232, %v1237
        %v1239 = vmul.f32 %v1238, 1.442695
        %v1240 = vpow.pop %v1239
        %v1241 = vsel %vm664, %v1240, 0.0
        %1242 = vadd.xlane.f32.xlu0 %v1241
        %v1243 = vpop.xlane.xlu0 %1242
        %v1244 = vrcp.pop %v1243
        %v1245 = vmul.f32 %v1240, %v1244
        %v1246 = vpack.c.bf16 %v1245, %v1245
        %1247 = vrot.lane.b32.xlu0 %v1212, 64
        %v1248 = vpop.permute.xlu0 %1247
        %v1250 = vsel %vm664, %v1246, 0
        %v1253 = vsel %vm701, %v1248, 0
        %1255 = vmatpush.bf16.msra.mxu0 0
        %1256 = vmatpush.bf16.msra.mxu0 0
        %1257 = vmatpush.bf16.msra.mxu0 0
        %1258 = vmatpush.bf16.msra.mxu0 0
        %1259 = vmatpush.bf16.msra.mxu0 0
        %1260 = vmatpush.bf16.msra.mxu0 0
        %1261 = vmatpush.bf16.msra.mxu0 0
        %1262 = vmatpush.bf16.msra.mxu0 %v1253
        %1263 = vmatmul.bf16.gmra.mxu0 %v1250
        %v1264 = vpop.f32.mrf.mxu0
        %v1265 = vadd.f32 0.0, %v1264
        %v1266 = vpop.f32.mrf.mxu0
        %1267 = vdwg.mxu0
        %v1268 = vpack.c.bf16 %v1265, %v1265
        %1270 = vrot.lane.b32.xlu0 %v1211, 120
        %v1271 = vpop.permute.xlu0 %1270
        %1272 = vrot.lane.b32.xlu0 %v1212, 88
        %v1273 = vpop.permute.xlu0 %1272
        %v1275 = vsel %vm664, %v1271, 0
        %v1278 = vsel %vm664, %v1273, 0
        %1280 = vmatpush.bf16.xpose.msra.mxu0 0
        %1281 = vmatpush.bf16.xpose.msra.mxu0 0
        %1282 = vmatpush.bf16.xpose.msra.mxu0 0
        %1283 = vmatpush.bf16.xpose.msra.mxu0 0
        %1284 = vmatpush.bf16.xpose.msra.mxu0 0
        %1285 = vmatpush.bf16.xpose.msra.mxu0 0
        %1286 = vmatpush.bf16.xpose.msra.mxu0 0
        %1287 = vmatpush.bf16.xpose.msra.mxu0 %v1278
        %1288 = vmatmul.bf16.gmra.mxu0 %v1275
        %v1289 = vpop.f32.mrf.mxu0
        %v1290 = vadd.f32 %v659, %v1289
        %v1291 = vpop.f32.mrf.mxu0
        %1292 = vdwg.mxu0
        %v1293 = vsel %vm664, %v1290, -inf
        %1294 = vmax.xlane.f32.xlu0 %v1293
        %v1295 = vpop.xlane.xlu0 %1294
        %v1296 = vsub.f32 %v1290, %v1295
        %v1297 = vmul.f32 %v1296, 1.442695
        %v1298 = vpow.pop %v1297
        %v1299 = vsel %vm664, %v1298, 0.0
        %1300 = vadd.xlane.f32.xlu0 %v1299
        %v1301 = vpop.xlane.xlu0 %1300
        %v1302 = vrcp.pop %v1301
        %v1303 = vmul.f32 %v1298, %v1302
        %v1304 = vpack.c.bf16 %v1303, %v1303
        %1305 = vrot.lane.b32.xlu0 %v1212, 56
        %v1306 = vpop.permute.xlu0 %1305
        %v1308 = vsel %vm664, %v1304, 0
        %v1311 = vsel %vm701, %v1306, 0
        %1313 = vmatpush.bf16.msra.mxu0 0
        %1314 = vmatpush.bf16.msra.mxu0 0
        %1315 = vmatpush.bf16.msra.mxu0 0
        %1316 = vmatpush.bf16.msra.mxu0 0
        %1317 = vmatpush.bf16.msra.mxu0 0
        %1318 = vmatpush.bf16.msra.mxu0 0
        %1319 = vmatpush.bf16.msra.mxu0 0
        %1320 = vmatpush.bf16.msra.mxu0 %v1311
        %1321 = vmatmul.bf16.gmra.mxu0 %v1308
        %v1322 = vpop.f32.mrf.mxu0
        %v1323 = vadd.f32 0.0, %v1322
        %v1324 = vpop.f32.mrf.mxu0
        %1325 = vdwg.mxu0
        %v1326 = vpack.c.bf16 %v1323, %v1323
        %v1328 = vsel %vm664, %v1326, 0
        %v1331 = vsel %vm701, %v1207, 0
        %1333 = vmatpush.bf16.msra.mxu0 0
        %1334 = vmatpush.bf16.msra.mxu0 0
        %1335 = vmatpush.bf16.msra.mxu0 0
        %1336 = vmatpush.bf16.msra.mxu0 0
        %1337 = vmatpush.bf16.msra.mxu0 0
        %1338 = vmatpush.bf16.msra.mxu0 0
        %1339 = vmatpush.bf16.msra.mxu0 0
        %1340 = vmatpush.bf16.msra.mxu0 %v1331
        %1341 = vmatmul.bf16.gmra.mxu0 %v1328
        %v1342 = vpop.f32.mrf.mxu0
        %v1343 = vadd.f32 0.0, %v1342
        %v1344 = vpop.f32.mrf.mxu0
        %1345 = vdwg.mxu0
        %v1347 = vsel %vm664, %v1268, 0
        %v1350 = vsel %vm701, %v1206, 0
        %1352 = vmatpush.bf16.msra.mxu0 0
        %1353 = vmatpush.bf16.msra.mxu0 0
        %1354 = vmatpush.bf16.msra.mxu0 0
        %1355 = vmatpush.bf16.msra.mxu0 0
        %1356 = vmatpush.bf16.msra.mxu0 0
        %1357 = vmatpush.bf16.msra.mxu0 0
        %1358 = vmatpush.bf16.msra.mxu0 0
        %1359 = vmatpush.bf16.msra.mxu0 %v1350
        %1360 = vmatmul.bf16.gmra.mxu0 %v1347
        %v1361 = vpop.f32.mrf.mxu0
        %v1362 = vadd.f32 %v1343, %v1361
        %v1363 = vpop.f32.mrf.mxu0
        %1364 = vdwg.mxu0
        %1365 = vrot.lane.b32.xlu0 %v1211, 112
        %v1366 = vpop.permute.xlu0 %1365
        %1367 = vrot.lane.b32.xlu0 %v1212, 80
        %v1368 = vpop.permute.xlu0 %1367
        %v1370 = vsel %vm664, %v1366, 0
        %v1373 = vsel %vm664, %v1368, 0
        %1375 = vmatpush.bf16.xpose.msra.mxu0 0
        %1376 = vmatpush.bf16.xpose.msra.mxu0 0
        %1377 = vmatpush.bf16.xpose.msra.mxu0 0
        %1378 = vmatpush.bf16.xpose.msra.mxu0 0
        %1379 = vmatpush.bf16.xpose.msra.mxu0 0
        %1380 = vmatpush.bf16.xpose.msra.mxu0 0
        %1381 = vmatpush.bf16.xpose.msra.mxu0 0
        %1382 = vmatpush.bf16.xpose.msra.mxu0 %v1373
        %1383 = vmatmul.bf16.gmra.mxu0 %v1370
        %v1384 = vpop.f32.mrf.mxu0
        %v1385 = vadd.f32 %v659, %v1384
        %v1386 = vpop.f32.mrf.mxu0
        %1387 = vdwg.mxu0
        %v1388 = vsel %vm664, %v1385, -inf
        %1389 = vmax.xlane.f32.xlu0 %v1388
        %v1390 = vpop.xlane.xlu0 %1389
        %v1391 = vsub.f32 %v1385, %v1390
        %v1392 = vmul.f32 %v1391, 1.442695
        %v1393 = vpow.pop %v1392
        %v1394 = vsel %vm664, %v1393, 0.0
        %1395 = vadd.xlane.f32.xlu0 %v1394
        %v1396 = vpop.xlane.xlu0 %1395
        %v1397 = vrcp.pop %v1396
        %v1398 = vmul.f32 %v1393, %v1397
        %v1399 = vpack.c.bf16 %v1398, %v1398
        %1400 = vrot.lane.b32.xlu0 %v1212, 48
        %v1401 = vpop.permute.xlu0 %1400
        %v1403 = vsel %vm664, %v1399, 0
        %v1406 = vsel %vm701, %v1401, 0
        %1408 = vmatpush.bf16.msra.mxu0 0
        %1409 = vmatpush.bf16.msra.mxu0 0
        %1410 = vmatpush.bf16.msra.mxu0 0
        %1411 = vmatpush.bf16.msra.mxu0 0
        %1412 = vmatpush.bf16.msra.mxu0 0
        %1413 = vmatpush.bf16.msra.mxu0 0
        %1414 = vmatpush.bf16.msra.mxu0 0
        %1415 = vmatpush.bf16.msra.mxu0 %v1406
        %1416 = vmatmul.bf16.gmra.mxu0 %v1403
        %v1417 = vpop.f32.mrf.mxu0
        %v1418 = vadd.f32 0.0, %v1417
        %v1419 = vpop.f32.mrf.mxu0
        %1420 = vdwg.mxu0
        %v1421 = vpack.c.bf16 %v1418, %v1418
        %v1423 = vsel %vm664, %v1421, 0
        %v1426 = vsel %vm701, %v1208, 0
        %1428 = vmatpush.bf16.msra.mxu0 0
        %1429 = vmatpush.bf16.msra.mxu0 0
        %1430 = vmatpush.bf16.msra.mxu0 0
        %1431 = vmatpush.bf16.msra.mxu0 0
        %1432 = vmatpush.bf16.msra.mxu0 0
        %1433 = vmatpush.bf16.msra.mxu0 0
        %1434 = vmatpush.bf16.msra.mxu0 0
        %1435 = vmatpush.bf16.msra.mxu0 %v1426
        %1436 = vmatmul.bf16.gmra.mxu0 %v1423
        %v1437 = vpop.f32.mrf.mxu0
        %v1438 = vadd.f32 0.0, %v1437
        %v1439 = vpop.f32.mrf.mxu0
        %1440 = vdwg.mxu0
        %v1441 = vadd.f32 %v1362, %v1438
        %1442 = vrot.lane.b32.xlu0 %v1211, 104
        %v1443 = vpop.permute.xlu0 %1442
        %1444 = vrot.lane.b32.xlu0 %v1212, 72
        %v1445 = vpop.permute.xlu0 %1444
        %v1447 = vsel %vm664, %v1443, 0
        %v1450 = vsel %vm664, %v1445, 0
        %1452 = vmatpush.bf16.xpose.msra.mxu0 0
        %1453 = vmatpush.bf16.xpose.msra.mxu0 0
        %1454 = vmatpush.bf16.xpose.msra.mxu0 0
        %1455 = vmatpush.bf16.xpose.msra.mxu0 0
        %1456 = vmatpush.bf16.xpose.msra.mxu0 0
        %1457 = vmatpush.bf16.xpose.msra.mxu0 0
        %1458 = vmatpush.bf16.xpose.msra.mxu0 0
        %1459 = vmatpush.bf16.xpose.msra.mxu0 %v1450
        %1460 = vmatmul.bf16.gmra.mxu0 %v1447
        %v1461 = vpop.f32.mrf.mxu0
        %v1462 = vadd.f32 %v659, %v1461
        %v1463 = vpop.f32.mrf.mxu0
        %1464 = vdwg.mxu0
        %v1465 = vsel %vm664, %v1462, -inf
        %1466 = vmax.xlane.f32.xlu0 %v1465
        %v1467 = vpop.xlane.xlu0 %1466
        %v1468 = vsub.f32 %v1462, %v1467
        %v1469 = vmul.f32 %v1468, 1.442695
        %v1470 = vpow.pop %v1469
        %v1471 = vsel %vm664, %v1470, 0.0
        %1472 = vadd.xlane.f32.xlu0 %v1471
        %v1473 = vpop.xlane.xlu0 %1472
        %v1474 = vrcp.pop %v1473
        %v1475 = vmul.f32 %v1470, %v1474
        %v1476 = vpack.c.bf16 %v1475, %v1475
        %1477 = vrot.lane.b32.xlu0 %v1212, 40
        %v1478 = vpop.permute.xlu0 %1477
        %v1480 = vsel %vm664, %v1476, 0
        %v1483 = vsel %vm701, %v1478, 0
        %1485 = vmatpush.bf16.msra.mxu0 0
        %1486 = vmatpush.bf16.msra.mxu0 0
        %1487 = vmatpush.bf16.msra.mxu0 0
        %1488 = vmatpush.bf16.msra.mxu0 0
        %1489 = vmatpush.bf16.msra.mxu0 0
        %1490 = vmatpush.bf16.msra.mxu0 0
        %1491 = vmatpush.bf16.msra.mxu0 0
        %1492 = vmatpush.bf16.msra.mxu0 %v1483
        %1493 = vmatmul.bf16.gmra.mxu0 %v1480
        %v1494 = vpop.f32.mrf.mxu0
        %v1495 = vadd.f32 0.0, %v1494
        %v1496 = vpop.f32.mrf.mxu0
        %1497 = vdwg.mxu0
        %v1498 = vpack.c.bf16 %v1495, %v1495
        %v1500 = vsel %vm664, %v1498, 0
        %v1503 = vsel %vm701, %v1209, 0
        %1505 = vmatpush.bf16.msra.mxu0 0
        %1506 = vmatpush.bf16.msra.mxu0 0
        %1507 = vmatpush.bf16.msra.mxu0 0
        %1508 = vmatpush.bf16.msra.mxu0 0
        %1509 = vmatpush.bf16.msra.mxu0 0
        %1510 = vmatpush.bf16.msra.mxu0 0
        %1511 = vmatpush.bf16.msra.mxu0 0
        %1512 = vmatpush.bf16.msra.mxu0 %v1503
        %1513 = vmatmul.bf16.gmra.mxu0 %v1500
        %v1514 = vpop.f32.mrf.mxu0
        %v1515 = vadd.f32 0.0, %v1514
        %v1516 = vpop.f32.mrf.mxu0
        %1517 = vdwg.mxu0
        %v1518 = vadd.f32 %v1441, %v1515
        %v1519 = vadd.f32 %v1115, %v1518
        %s1520 = scalar_lea.vmem %s5, 1
        %v1521 = vld [vmem:[%s1520] sm:$0x1]
        %v1523 = vperm.slane %v1521, 0
        %v1525 = vadd.f32 %v1519, %v1523
        %s1526 = scalar_lea.vmem %s12, 1
        %v1527 = vld [vmem:[%s1526] sm:$0x1]
        %s1528 = scalar_lea.vmem %s13, 1
        %v1529 = vld [vmem:[%s1528] sm:$0x1]
        %v1530 = vsel %vm560, %v1525, 0.0
        %1531 = vadd.xlane.f32.xlu0 %v1530
        %v1532 = vpop.xlane.xlu0 %1531
        %v1533 = vmul.f32 %v1532, %v570
        %v1534 = vsub.f32 %v1525, %v1533
        %v1535 = vmul.f32 %v1534, %v1534
        %v1536 = vsel %vm560, %v1535, 0.0
        %1537 = vadd.xlane.f32.xlu0 %v1536
        %v1538 = vpop.xlane.xlu0 %1537
        %v1539 = vmul.f32 %v1538, 0.032258064
        %v1541 = vperm.slane %v1527, 0
        %v1543 = vmul.f32 %v1541, %v1534
        %v1544 = vrsqrt.pop %v1539
        %v1545 = vmul.f32 %v1544, %v1539
        %v1546 = vmul.f32 %v1545, %v1544
        %v1547 = vmul.f32 0.5, %v1546
        %v1548 = vsub.f32 1.5, %v1547
        %v1549 = vmul.f32 %v1544, %v1548
        %v1550 = vmul.f32 %v1539, %v1549
        %vm1551 = vcmp.eq.f32.partialorder %v1539, inf
        %v1552 = vsel %vm1551, %v1539, %v1550
        %vm1553 = vcmp.eq.f32.partialorder %v1539, 0.0
        %v1554 = vand.u32 %v1539, 2147483648
        %v1555 = vsel %vm1553, %v1554, %v1552
        %v1556 = vadd.f32 %v1555, 1e-06
        %v1557 = vrcp.pop %v1556
        %v1558 = vmul.f32 %v1556, %v1557
        %v1559 = vsub.f32 1.0, %v1558
        %v1560 = vmul.f32 %v1557, %v1559
        %v1561 = vadd.f32 %v1557, %v1560
        %vm1562 = vweird.f32 %v1556
        %vm1563 = vweird.f32 %v1557
        %vm1564 = vmor %vm1562, %vm1563
        %v1565 = vsel %vm1564, %v1557, %v1561
        %v1566 = vand.u32 2147483647, %v1556
        %vm1567 = vcmp.eq.f32.partialorder %v1566, 8.507059e+37
        %v1568 = vand.u32 %v1556, 2147483648
        %v1569 = vor.u32 1.1754944e-38, %v1568
        %v1570 = vsel %vm1567, %v1569, %v1565
        %v1571 = vmul.f32 %v1543, %v1570
        %v1573 = vperm.slane %v1529, 0
        %v1575 = vadd.f32 %v1571, %v1573
        %v1576 = vpack.c.bf16 %v1575, %v1575
        %s1577 = scalar_lea.vmem %s6, 16
        %v1578 = vld [vmem:[%s1577] sm:$0xf]
        %v1579 = vld [vmem:[%s1577 + $0x4] sm:$0xf]
        %v1580 = vld [vmem:[%s1577 + $0x8] sm:$0xf]
        %v1581 = vld [vmem:[%s1577 + $0xc] sm:$0xf]
        %s1582 = scalar_lea.vmem %s7, 1
        %v1583 = vld [vmem:[%s1582] sm:$0x1]
        %v1585 = vperm.slane %v1583, 0
        %v1591 = vunpack.c.l.b16 %v1578
        %v1592 = vunpack.c.l.b16 %v1579
        %v1593 = vunpack.c.l.b16 %v1580
        %v1594 = vunpack.c.l.b16 %v1581
        %v1595 = vpack.c.b16 %v1592, %v1591
        %v1596 = vpack.c.b16 %v1594, %v1593
        %v1600 = vsel %vm560, %v1576, 0
        %1602 = vmatpush.bf16.msra.mxu0 0
        %1603 = vmatpush.bf16.msra.mxu0 0
        %1604 = vmatpush.bf16.msra.mxu0 0
        %1605 = vmatpush.bf16.msra.mxu0 0
        %1606 = vmatpush.bf16.msra.mxu0 0
        %1607 = vmatpush.bf16.msra.mxu0 0
        %1608 = vmatpush.bf16.msra.mxu0 %v1596
        %1609 = vmatpush.bf16.msra.mxu0 %v1595
        %1610 = vmatmul.bf16.gmra.mxu0 %v1600
        %v1611 = vpop.f32.mrf.mxu0
        %v1612 = vadd.f32 %v1585, %v1611
        %v1613 = vpop.f32.mrf.mxu0
        %1614 = vdwg.mxu0
        %v1615 = vmax.f32 %v1612, 0.0
        %v1616 = vpack.c.bf16 %v1615, %v1615
        %s1617 = scalar_lea.vmem %s8, 32
        %v1618 = vld [vmem:[%s1617] sm:$0xf]
        %v1619 = vld [vmem:[%s1617 + $0x4] sm:$0xf]
        %v1620 = vld [vmem:[%s1617 + $0x8] sm:$0xf]
        %v1621 = vld [vmem:[%s1617 + $0xc] sm:$0xf]
        %v1622 = vld [vmem:[%s1617 + $0x10] sm:$0xf]
        %v1623 = vld [vmem:[%s1617 + $0x14] sm:$0xf]
        %v1624 = vld [vmem:[%s1617 + $0x18] sm:$0xf]
        %v1625 = vld [vmem:[%s1617 + $0x1c] sm:$0xf]
        %s1626 = scalar_lea.vmem %s9, 1
        %v1627 = vld [vmem:[%s1626] sm:$0x1]
        %v1629 = vperm.slane %v1627, 0
        %v1639 = vunpack.c.l.b16 %v1618
        %v1640 = vunpack.c.l.b16 %v1619
        %v1641 = vunpack.c.l.b16 %v1620
        %v1642 = vunpack.c.l.b16 %v1621
        %v1643 = vunpack.c.l.b16 %v1622
        %v1644 = vunpack.c.l.b16 %v1623
        %v1645 = vunpack.c.l.b16 %v1624
        %v1646 = vunpack.c.l.b16 %v1625
        %v1647 = vpack.c.b16 %v1640, %v1639
        %v1648 = vpack.c.b16 %v1642, %v1641
        %v1649 = vpack.c.b16 %v1644, %v1643
        %v1650 = vpack.c.b16 %v1646, %v1645
        %v1656 = vsel %vm1098, %v1616, 0
        %1658 = vmatpush.bf16.msra.mxu0 0
        %1659 = vmatpush.bf16.msra.mxu0 0
        %1660 = vmatpush.bf16.msra.mxu0 0
        %1661 = vmatpush.bf16.msra.mxu0 0
        %1662 = vmatpush.bf16.msra.mxu0 %v1650
        %1663 = vmatpush.bf16.msra.mxu0 %v1649
        %1664 = vmatpush.bf16.msra.mxu0 %v1648
        %1665 = vmatpush.bf16.msra.mxu0 %v1647
        %1666 = vmatmul.bf16.gmra.mxu0 %v1656
        %v1667 = vpop.f32.mrf.mxu0
        %v1668 = vadd.f32 %v1629, %v1667
        %v1669 = vpop.f32.mrf.mxu0
        %1670 = vdwg.mxu0
        %v1671 = vadd.f32 %v1525, %v1668
        %v1672 = vld [vmem:[%s14] sm:$0x1]
        %v1673 = vld [vmem:[%s15] sm:$0x1]
        %v1674 = vsel %vm560, %v1671, 0.0
        %1675 = vadd.xlane.f32.xlu0 %v1674
        %v1676 = vpop.xlane.xlu0 %1675
        %v1677 = vmul.f32 %v1676, %v570
        %v1678 = vsub.f32 %v1671, %v1677
        %v1679 = vmul.f32 %v1678, %v1678
        %v1680 = vsel %vm560, %v1679, 0.0
        %1681 = vadd.xlane.f32.xlu0 %v1680
        %v1682 = vpop.xlane.xlu0 %1681
        %v1683 = vmul.f32 %v1682, 0.032258064
        %v1685 = vperm.slane %v1672, 0
        %v1687 = vmul.f32 %v1685, %v1678
        %v1688 = vrsqrt.pop %v1683
        %v1689 = vmul.f32 %v1688, %v1683
        %v1690 = vmul.f32 %v1689, %v1688
        %v1691 = vmul.f32 0.5, %v1690
        %v1692 = vsub.f32 1.5, %v1691
        %v1693 = vmul.f32 %v1688, %v1692
        %v1694 = vmul.f32 %v1683, %v1693
        %vm1695 = vcmp.eq.f32.partialorder %v1683, inf
        %v1696 = vsel %vm1695, %v1683, %v1694
        %vm1697 = vcmp.eq.f32.partialorder %v1683, 0.0
        %v1698 = vand.u32 %v1683, 2147483648
        %v1699 = vsel %vm1697, %v1698, %v1696
        %v1700 = vadd.f32 %v1699, 1e-06
        %v1701 = vrcp.pop %v1700
        %v1702 = vmul.f32 %v1700, %v1701
        %v1703 = vsub.f32 1.0, %v1702
        %v1704 = vmul.f32 %v1701, %v1703
        %v1705 = vadd.f32 %v1701, %v1704
        %vm1706 = vweird.f32 %v1700
        %vm1707 = vweird.f32 %v1701
        %vm1708 = vmor %vm1706, %vm1707
        %v1709 = vsel %vm1708, %v1701, %v1705
        %v1710 = vand.u32 2147483647, %v1700
        %vm1711 = vcmp.eq.f32.partialorder %v1710, 8.507059e+37
        %v1712 = vand.u32 %v1700, 2147483648
        %v1713 = vor.u32 1.1754944e-38, %v1712
        %v1714 = vsel %vm1711, %v1713, %v1709
        %v1715 = vmul.f32 %v1687, %v1714
        %v1717 = vperm.slane %v1673, 0
        %v1719 = vadd.f32 %v1715, %v1717
        %1720 = vst.msk [vmem:[%s549] sm:$0xff] %vm560, %v1719
        %s1721 = sand.u32 %s387, 1
        %s1722 = scalar_lea.sflag [#allocation4], %s1721
        %s1723 = sand.u32 %s387, 1
        %s1724 = smul.addr %s1723, 8
        %s1725 = scalar_lea.vmem [#allocation5], %s1724
        // Predicated region
        $region89: #{_lambda_.1} parent=83 // pred_check
          %p1726 = pneg %p397
        $region90: #{_lambda_.1} parent=83 // pred_check_branch
          %1728 = sbr.rel (%p1726) target = $region92
        $region91: #{_lambda_.1} parent=83 // pred_region
          %1730 = vsyncadd %s1722, 0
          %s1731 = smul.addr %s33, 8
          %s1732 = scalar_lea.hbm %s16, %s1731
          %s1734 = sshll.u32 %s1725, 4
          %s1735 = int_to_ptr.vmem [resolvable:$true] %s1734
          %s1736 = sshll.u32 %s1732, 4
          %s1737 = int_to_ptr.hbm [resolvable:$true] %s1736
          %1739 = dma.vmem_to_hbm [thread:$0]  %s1735, 128, %s1737, %s1722
        $region92: #{_lambda_.1} parent=83 // pred_fallthru
          _
      $region84: #{_lambda_.1} parent=5 // pred_fallthru
        _
      %p1740 = scmp.le.s32.totalorder 2, %s28
      // Predicated region
      $region93: #{_lambda_.1} parent=5 // pred_check
        %p1741 = pneg %p1740
      $region94: #{_lambda_.1} parent=5 // pred_check_branch
        %1743 = sbr.rel (%p1741) target = $region96
      $region95: #{_lambda_.1} parent=5 // pred_region
        %s1744 = ssub.s32 %s28, 2
        // Predicated region
        $region97: #{_lambda_.1} parent=95 // pred_check
          %p1745 = pneg %p403
        $region98: #{_lambda_.1} parent=95 // pred_check_branch
          %1747 = sbr.rel (%p1745) target = $region100
        $region99: #{_lambda_.1} parent=95 // pred_region
          %s1748 = sand.u32 %s388, 1
          %s1749 = scalar_lea.sflag [#allocation4], %s1748
          %s1750 = sand.u32 %s388, 1
          %s1751 = smul.addr %s1750, 8
          %s1752 = scalar_lea.vmem [#allocation5], %s1751
          %1754 = dma.done %s1749, 128
        $region100: #{_lambda_.1} parent=95 // pred_fallthru
          _
      $region96: #{_lambda_.1} parent=5 // pred_fallthru
        _
    $region6: #{_lambda_.1} parent=1 // loop_footer
      %s32 = sadd.s32 1, %s28
    $region7: #{_lambda_.1} parent=1 // loop_footer_branch
      %27 = sbr.rel target = $region3
    $region8: #{_lambda_.1} parent=1 // loop_exit
      _
    %1755 = vsyncpa [#allocation3], 1
    %s1756 = scalar_lea.sflag [#allocation3], 1
    %1757 = vsyncpa %s1756, 1
    %1758 = vsyncpa [#allocation4], 1
    %s1759 = scalar_lea.sflag [#allocation4], 1
    %1760 = vsyncpa %s1759, 1

</llo_original>
